<compile_context>
chip_gen: v7x
topology: tpu7x:2x2x1
jax: 0.10.0
libtpu: 0.0.40
codegen_flags: <defaults>
</compile_context>

<pallas_src>
import functools
import math

import jax
import jax.numpy as jnp
from jax.experimental import pallas as pl
from jax.experimental.pallas import tpu as pltpu


def _round_up(a: int, m: int) -> int:
    return ((a + m - 1) // m) * m


def _attnpool_kernel(
    x_ref,     # (TB, S, C)  bf16  tokens (CLS + spatial) with pos-emb added
    wqT_ref,   # (C, C)      bf16  Wq^T
    bq_ref,    # (1, C)      f32
    wkT_ref,   # (C, C)      bf16  Wk^T
    bk_ref,    # (1, C)      f32
    wvT_ref,   # (C, C)      bf16  Wv^T
    bv_ref,    # (1, C)      f32
    segT_ref,  # (H, C)      bf16  segT[h, c] = 1 iff c // head_dim == h
    woT_ref,   # (C, C)      bf16  out_proj.weight^T
    bo_ref,    # (1, C)      f32
    wcT_ref,   # (C, Dp)     bf16  c_proj.weight^T, zero-padded to Dp lanes
    bc_ref,    # (1, Dp)     f32   zero-padded
    y_ref,     # (TB, Dp)    f32
    att_ref,   # (TB, Sp)    f32   head-averaged CLS attention, lane-padded
    *,
    num_heads,
    head_dim,
):
    TB, S, C = x_ref.shape
    H = num_heads
    Sp = att_ref.shape[-1]
    scale = 1.0 / math.sqrt(head_dim)

    x = x_ref[...]                                   # (TB, S, C) bf16
    x_flat = x.reshape(TB * S, C)
    q_in = x[:, 0, :]                                # (TB, C) bf16 -- CLS rows

    # ---- in-projections: bf16 MXU matmuls, f32 accumulation ----
    q = jnp.dot(q_in, wqT_ref[...],
                preferred_element_type=jnp.float32) + bq_ref[...]
    q = q * scale                                                  # (TB, C) f32

    k = (jnp.dot(x_flat, wkT_ref[...], preferred_element_type=jnp.float32)
         + bk_ref[...]).astype(jnp.bfloat16).reshape(TB, S, C)     # bf16
    v_flat = (jnp.dot(x_flat, wvT_ref[...], preferred_element_type=jnp.float32)
              + bv_ref[...]).astype(jnp.bfloat16)                  # (TB*S, C)

    # ---- per-head scores without a head loop ----
    # qk[b,s,c] = q[b,c]*k[b,s,c];  scores[b,s,h] = sum_{c in head h} qk
    qk = (q[:, None, :] * k).reshape(TB * S, C)       # f32 elementwise (v5e VPU)
    scores = jax.lax.dot_general(
        qk.astype(jnp.bfloat16), segT_ref[...], (((1,), (1,)), ((), ())),
        preferred_element_type=jnp.float32).reshape(TB, S, H)

    # ---- softmax over the S keys (axis=1), f32 ----
    m = jnp.max(scores, axis=1, keepdims=True)                     # (TB, 1, H)
    e = jnp.exp(scores - m)                                        # (TB, S, H)
    denom = jnp.sum(e, axis=1, keepdims=True)
    p = e * pl.reciprocal(denom, approx=True)                      # (TB, S, H)

    # ---- context: broadcast p back to channel width and weight V ----
    p_exp = jnp.dot(p.reshape(TB * S, H).astype(jnp.bfloat16), segT_ref[...],
                    preferred_element_type=jnp.float32)            # (TB*S, C)
    ctx = jnp.sum((p_exp * v_flat).reshape(TB, S, C), axis=1)      # (TB, C) f32

    # ---- out_proj then (lane-padded) c_proj ----
    attn_out = jnp.dot(ctx.astype(jnp.bfloat16), woT_ref[...],
                       preferred_element_type=jnp.float32) + bo_ref[...]
    y = jnp.dot(attn_out.astype(jnp.bfloat16), wcT_ref[...],
                preferred_element_type=jnp.float32) + bc_ref[...]

    y_ref[...] = y.astype(y_ref.dtype)

    att = jnp.sum(p, axis=-1) * (1.0 / H)                          # (TB, S)
    if Sp > S:  # lane-dense store: pad the key axis of the *output* only
        att = jnp.concatenate(
            [att, jnp.zeros((TB, Sp - S), att.dtype)], axis=-1)
    att_ref[...] = att.astype(att_ref.dtype)


def init_params(key, spacial_dim, embed_dim, num_heads, output_dim):
    ks = jax.random.split(key, 8)
    C, Dout = embed_dim, output_dim
    return {
        "pos_emb": jax.random.normal(ks[0], (1, spacial_dim + 1, C), jnp.float32) / C,
        "cls_token": jax.random.normal(ks[1], (1, 1, C), jnp.float32),
        "in_proj_weight": jax.random.normal(ks[2], (3 * C, C), jnp.float32) * 0.05,
        "in_proj_bias": jax.random.normal(ks[3], (3 * C,), jnp.float32) * 0.05,
        "out_proj_weight": jax.random.normal(ks[4], (C, C), jnp.float32) * 0.05,
        "out_proj_bias": jax.random.normal(ks[5], (C,), jnp.float32) * 0.05,
        "c_proj_weight": jax.random.normal(ks[6], (Dout, C), jnp.float32) * 0.05,
        "c_proj_bias": jax.random.normal(ks[7], (Dout,), jnp.float32) * 0.05,
    }


def _vmem_budget():
    # 75% of the chip's physical VMEM, capped: portable across v5e/v6e
    # (128 MiB) and v7x (64 MiB) without per-generation hand tuning.
    try:
        cap = int(pltpu.get_tpu_info().vmem_capacity_bytes)
    except Exception:
        cap = 64 * 1024 * 1024
    return min((cap * 3) // 4, 100 * 1024 * 1024)


def _pick_tile(tile_b, B, S, C, H, Dp, Sp, weight_bytes, vmem_budget):
    """Largest batch tile (multiple of 8) whose footprint fits the budget."""
    B8 = _round_up(max(B, 1), 8)
    tile = max(8, min(_round_up(tile_b, 8), B8))

    def est(t):
        io = 2 * t * S * C * 2 + 2 * t * Dp * 4 + 2 * t * Sp * 4   # dbl-buffered x/y/att
        inter = t * S * (16 * C + 8 * H)                           # live bf16/f32 temps
        return io + inter + weight_bytes

    while tile > 8 and est(tile) > vmem_budget:
        tile = _round_up(tile // 2, 8)

    # v7x has 2 TensorCores: keep >=2 grid steps when the batch allows it so
    # the "parallel" batch axis can be split across both cores.
    if tile >= B8 and B8 >= 16:
        tile = _round_up(B8 // 2, 8)
    return tile


def attention_pool_2d(x, params, num_heads, *, tile_b=256):
    """x: (B, embed_dim, spacial_dim) float32.  Returns (pooled, att_map)."""
    B, C, N = x.shape
    S = N + 1
    H = num_heads
    dh = C // H
    Dout = params["c_proj_weight"].shape[0]
    Dp = _round_up(Dout, 128)        # lane-dense c_proj output width
    Sp = _round_up(S, 128)           # lane-dense attention-map width

    # ---- glue (plain JAX): permute, CLS concat, positional embedding ----
    xt = jnp.transpose(x, (0, 2, 1))                                  # (B, N, C)
    cls = params["cls_token"] + params["pos_emb"][:, :1, :]
    cls = jnp.broadcast_to(cls, (B, 1, C))
    xs = jnp.concatenate([cls, xt], axis=1) + params["pos_emb"]       # (B, S, C)

    # ---- parameter repacking (once per call, outside the kernel) ----
    wqT = params["in_proj_weight"][:C].T.astype(jnp.bfloat16)
    wkT = params["in_proj_weight"][C:2 * C].T.astype(jnp.bfloat16)
    wvT = params["in_proj_weight"][2 * C:].T.astype(jnp.bfloat16)
    bq = params["in_proj_bias"][:C].reshape(1, C).astype(jnp.float32)
    bk = params["in_proj_bias"][C:2 * C].reshape(1, C).astype(jnp.float32)
    bv = params["in_proj_bias"][2 * C:].reshape(1, C).astype(jnp.float32)
    woT = params["out_proj_weight"].T.astype(jnp.bfloat16)
    bo = params["out_proj_bias"].reshape(1, C).astype(jnp.float32)
    wcT = jnp.pad(params["c_proj_weight"].T,
                  ((0, 0), (0, Dp - Dout))).astype(jnp.bfloat16)       # (C, Dp)
    bc = jnp.pad(params["c_proj_bias"],
                 (0, Dp - Dout)).reshape(1, Dp).astype(jnp.float32)
    # 0/1 head-segment matrix (exact in bf16): segT[h, c] = 1 iff c // dh == h.
    segT = (jnp.arange(C)[None, :] // dh
            == jnp.arange(H)[:, None]).astype(jnp.bfloat16)            # (H, C)

    weight_bytes = 2 * (4 * C * C + H * C + C * Dp) + 4 * (4 * C + Dp)
    vmem_limit = _vmem_budget()
    tile = _pick_tile(tile_b, B, S, C, H, Dp, Sp, weight_bytes, vmem_limit)

    B_pad = _round_up(B, tile)
    if B_pad != B:
        # Padded rows are all-zero tokens: finite everywhere, sliced off below.
        xs = jnp.pad(xs, ((0, B_pad - B), (0, 0), (0, 0)))
    xs_bf = xs.astype(jnp.bfloat16)

    kernel = functools.partial(_attnpool_kernel, num_heads=H, head_dim=dh)

    def _const(shape):   # constant block index -> DMA'd once; single-buffered
        nd = len(shape)
        return pl.BlockSpec(shape, lambda b, _n=nd: (0,) * _n,
                            pipeline_mode=pl.Buffered(1))

    y_pad, att_pad = pl.pallas_call(
        kernel,
        out_shape=(
            jax.ShapeDtypeStruct((B_pad, Dp), jnp.float32),
            jax.ShapeDtypeStruct((B_pad, Sp), jnp.float32),
        ),
        grid=(B_pad // tile,),
        in_specs=[
            pl.BlockSpec((tile, S, C), lambda b: (b, 0, 0)),
            _const((C, C)), _const((1, C)),          # Wq^T, bq
            _const((C, C)), _const((1, C)),          # Wk^T, bk
            _const((C, C)), _const((1, C)),          # Wv^T, bv
            _const((H, C)),                          # segT
            _const((C, C)), _const((1, C)),          # Wo^T, bo
            _const((C, Dp)), _const((1, Dp)),        # Wc^T, bc
        ],
        out_specs=(
            pl.BlockSpec((tile, Dp), lambda b: (b, 0)),
            pl.BlockSpec((tile, Sp), lambda b: (b, 0)),
        ),
        compiler_params=pltpu.CompilerParams(
            dimension_semantics=("parallel",),       # batch tiles split over TCs
            vmem_limit_bytes=int(vmem_limit),
        ),
    )(xs_bf, wqT, bq, wkT, bk, wvT, bv, segT, woT, bo, wcT, bc)

    y = y_pad[:B, :Dout][:, None, :]                 # (B, 1, Dout)
    att = att_pad[:B, 1:S][:, None, :]               # (B, 1, N)
    # torch's x.squeeze(0) only squeezes when batch == 1
    y_out = jnp.squeeze(y, axis=0) if B == 1 else y
    return y_out, att


def reference_forward(x, params, num_heads):
    """Pure-JAX f32 reference mirroring the PyTorch module semantics."""
    B, C, N = x.shape
    S = N + 1
    dh = C // num_heads
    xt = jnp.transpose(x, (0, 2, 1))
    cls = params["cls_token"] + params["pos_emb"][:, :1, :]
    cls = jnp.broadcast_to(cls, (B, 1, C))
    xs = jnp.concatenate([cls, xt], axis=1) + params["pos_emb"]
    q_in = xs[:, :1, :]
    Wq, Wk, Wv = jnp.split(params["in_proj_weight"], 3, axis=0)
    bq, bk, bv = jnp.split(params["in_proj_bias"], 3, axis=0)
    q = q_in @ Wq.T + bq
    k = xs @ Wk.T + bk
    v = xs @ Wv.T + bv
    qh = q.reshape(B, 1, num_heads, dh).transpose(0, 2, 1, 3)
    kh = k.reshape(B, S, num_heads, dh).transpose(0, 2, 1, 3)
    vh = v.reshape(B, S, num_heads, dh).transpose(0, 2, 1, 3)
    scores = jnp.einsum("bhqd,bhkd->bhqk", qh, kh) / jnp.sqrt(jnp.float32(dh))
    att = jax.nn.softmax(scores, axis=-1)
    ctx = jnp.einsum("bhqk,bhkd->bhqd", att, vh)
    ctx = ctx.transpose(0, 2, 1, 3).reshape(B, 1, C)
    attn_out = ctx @ params["out_proj_weight"].T + params["out_proj_bias"]
    y = attn_out @ params["c_proj_weight"].T + params["c_proj_bias"]
    att_avg = att.mean(axis=1)                      # (B, 1, S)
    y_out = jnp.squeeze(y, axis=0) if B == 1 else y
    return y_out, att_avg[:, :, 1:]


if __name__ == "__main__":
    B = 12                    # not a multiple of the batch tile -> exercises padding
    spacial_dim = 15          # -> sequence length 16 with CLS token
    embed_dim = 32
    num_heads = 4
    output_dim = 16

    key = jax.random.PRNGKey(0)
    k_param, k_x = jax.random.split(key)
    params = init_params(k_param, spacial_dim, embed_dim, num_heads, output_dim)
    x = jax.random.normal(k_x, (B, embed_dim, spacial_dim), jnp.float32)

    y, att = attention_pool_2d(x, params, num_heads)
    y, att = jax.block_until_ready((y, att))

    y_ref, att_ref = reference_forward(x, params, num_heads)
    assert y.shape == (B, 1, output_dim), y.shape
    assert att.shape == (B, 1, spacial_dim), att.shape
    # bf16 MXU operands (incl. the segT matmuls) + approx EUP reciprocal in the
    # kernel -> tolerances relaxed vs. the pure-f32 reference.
    assert jnp.allclose(y, y_ref, atol=1e-2, rtol=1e-2), "pooled output mismatch"
    assert jnp.allclose(att, att_ref, atol=2e-3, rtol=1e-2), "attention map mismatch"

    print("KERNEL_OK")
</pallas_src>

<mosaic_0001>
module attributes {stable_mosaic.version = 11 : i64} {
  func.func @_attnpool_kernel(%arg0: i32, %arg1: memref<8x16x32xbf16, #tpu.memory_space<vmem>>, %arg2: memref<32x32xbf16, #tpu.memory_space<vmem>>, %arg3: memref<1x32xf32, #tpu.memory_space<vmem>>, %arg4: memref<32x32xbf16, #tpu.memory_space<vmem>>, %arg5: memref<1x32xf32, #tpu.memory_space<vmem>>, %arg6: memref<32x32xbf16, #tpu.memory_space<vmem>>, %arg7: memref<1x32xf32, #tpu.memory_space<vmem>>, %arg8: memref<4x32xbf16, #tpu.memory_space<vmem>>, %arg9: memref<32x32xbf16, #tpu.memory_space<vmem>>, %arg10: memref<1x32xf32, #tpu.memory_space<vmem>>, %arg11: memref<32x128xbf16, #tpu.memory_space<vmem>>, %arg12: memref<1x128xf32, #tpu.memory_space<vmem>>, %arg13: memref<8x128xf32, #tpu.memory_space<vmem>>, %arg14: memref<8x128xf32, #tpu.memory_space<vmem>>) attributes {dimension_semantics = [#tpu.dimension_semantics<parallel>], iteration_bounds = array<i64: 2>, scalar_prefetch = 0 : i64, scratch_operands = 0 : i64, tpu.core_type = #tpu.core_type<tc>, window_params = [{transform_indices = @transform_0, window_bounds = array<i64: 8, 16, 32>}, {pipeline_mode = #tpu.pipeline_mode<synchronous>, transform_indices = @transform_1, window_bounds = array<i64: 32, 32>}, {pipeline_mode = #tpu.pipeline_mode<synchronous>, transform_indices = @transform_2, window_bounds = array<i64: 1, 32>}, {pipeline_mode = #tpu.pipeline_mode<synchronous>, transform_indices = @transform_3, window_bounds = array<i64: 32, 32>}, {pipeline_mode = #tpu.pipeline_mode<synchronous>, transform_indices = @transform_4, window_bounds = array<i64: 1, 32>}, {pipeline_mode = #tpu.pipeline_mode<synchronous>, transform_indices = @transform_5, window_bounds = array<i64: 32, 32>}, {pipeline_mode = #tpu.pipeline_mode<synchronous>, transform_indices = @transform_6, window_bounds = array<i64: 1, 32>}, {pipeline_mode = #tpu.pipeline_mode<synchronous>, transform_indices = @transform_7, window_bounds = array<i64: 4, 32>}, {pipeline_mode = #tpu.pipeline_mode<synchronous>, transform_indices = @transform_8, window_bounds = array<i64: 32, 32>}, {pipeline_mode = #tpu.pipeline_mode<synchronous>, transform_indices = @transform_9, window_bounds = array<i64: 1, 32>}, {pipeline_mode = #tpu.pipeline_mode<synchronous>, transform_indices = @transform_10, window_bounds = array<i64: 32, 128>}, {pipeline_mode = #tpu.pipeline_mode<synchronous>, transform_indices = @transform_11, window_bounds = array<i64: 1, 128>}, {transform_indices = @transform_12, window_bounds = array<i64: 8, 128>}, {transform_indices = @transform_13, window_bounds = array<i64: 8, 128>}]} {
    %c0 = arith.constant 0 : index
    %c0_0 = arith.constant 0 : index
    %c0_1 = arith.constant 0 : index
    %0 = vector.load %arg1[%c0, %c0_0, %c0_1] : memref<8x16x32xbf16, #tpu.memory_space<vmem>>, vector<8x16x32xbf16>
    %1 = vector.shape_cast %0 : vector<8x16x32xbf16> to vector<128x32xbf16>
    %2 = vector.extract_strided_slice %0 {offsets = [0, 0, 0], sizes = [8, 1, 32], strides = [1, 1, 1]} : vector<8x16x32xbf16> to vector<8x1x32xbf16>
    %3 = vector.shape_cast %2 : vector<8x1x32xbf16> to vector<8x32xbf16>
    %c0_2 = arith.constant 0 : index
    %c0_3 = arith.constant 0 : index
    %4 = vector.load %arg2[%c0_2, %c0_3] : memref<32x32xbf16, #tpu.memory_space<vmem>>, vector<32x32xbf16>
    %cst = arith.constant dense<0.000000e+00> : vector<8x32xf32>
    %5 = tpu.matmul %3, %4, %cst {dimension_numbers = #tpu.dot_dimension_numbers<[1], [0], [0], [1], [0, 0, 1, 1], [], []>} : vector<8x32xbf16>, vector<32x32xbf16>, vector<8x32xf32> -> vector<8x32xf32>
    %c0_4 = arith.constant 0 : index
    %c0_5 = arith.constant 0 : index
    %6 = vector.load %arg3[%c0_4, %c0_5] : memref<1x32xf32, #tpu.memory_space<vmem>>, vector<1x32xf32>
    %7 = vector.broadcast %6 : vector<1x32xf32> to vector<8x32xf32>
    %8 = arith.addf %5, %7 : vector<8x32xf32>
    %cst_6 = arith.constant 0.353553385 : f32
    %9 = vector.broadcast %cst_6 : f32 to vector<8x32xf32>
    %10 = arith.mulf %8, %9 : vector<8x32xf32>
    %c0_7 = arith.constant 0 : index
    %c0_8 = arith.constant 0 : index
    %11 = vector.load %arg4[%c0_7, %c0_8] : memref<32x32xbf16, #tpu.memory_space<vmem>>, vector<32x32xbf16>
    %cst_9 = arith.constant dense<0.000000e+00> : vector<128x32xf32>
    %12 = tpu.matmul %1, %11, %cst_9 {dimension_numbers = #tpu.dot_dimension_numbers<[1], [0], [0], [1], [0, 0, 1, 1], [], []>} : vector<128x32xbf16>, vector<32x32xbf16>, vector<128x32xf32> -> vector<128x32xf32>
    %c0_10 = arith.constant 0 : index
    %c0_11 = arith.constant 0 : index
    %13 = vector.load %arg5[%c0_10, %c0_11] : memref<1x32xf32, #tpu.memory_space<vmem>>, vector<1x32xf32>
    %14 = vector.broadcast %13 : vector<1x32xf32> to vector<128x32xf32>
    %15 = arith.addf %12, %14 : vector<128x32xf32>
    %16 = arith.truncf %15 : vector<128x32xf32> to vector<128x32xbf16>
    %17 = vector.shape_cast %16 : vector<128x32xbf16> to vector<8x16x32xbf16>
    %c0_12 = arith.constant 0 : index
    %c0_13 = arith.constant 0 : index
    %18 = vector.load %arg6[%c0_12, %c0_13] : memref<32x32xbf16, #tpu.memory_space<vmem>>, vector<32x32xbf16>
    %cst_14 = arith.constant dense<0.000000e+00> : vector<128x32xf32>
    %19 = tpu.matmul %1, %18, %cst_14 {dimension_numbers = #tpu.dot_dimension_numbers<[1], [0], [0], [1], [0, 0, 1, 1], [], []>} : vector<128x32xbf16>, vector<32x32xbf16>, vector<128x32xf32> -> vector<128x32xf32>
    %c0_15 = arith.constant 0 : index
    %c0_16 = arith.constant 0 : index
    %20 = vector.load %arg7[%c0_15, %c0_16] : memref<1x32xf32, #tpu.memory_space<vmem>>, vector<1x32xf32>
    %21 = vector.broadcast %20 : vector<1x32xf32> to vector<128x32xf32>
    %22 = arith.addf %19, %21 : vector<128x32xf32>
    %23 = arith.truncf %22 : vector<128x32xf32> to vector<128x32xbf16>
    %24 = vector.shape_cast %10 : vector<8x32xf32> to vector<8x1x32xf32>
    %25 = arith.extf %17 : vector<8x16x32xbf16> to vector<8x16x32xf32>
    %26 = vector.broadcast %24 : vector<8x1x32xf32> to vector<8x16x32xf32>
    %27 = arith.mulf %26, %25 : vector<8x16x32xf32>
    %28 = vector.shape_cast %27 : vector<8x16x32xf32> to vector<128x32xf32>
    %29 = arith.truncf %28 : vector<128x32xf32> to vector<128x32xbf16>
    %c0_17 = arith.constant 0 : index
    %c0_18 = arith.constant 0 : index
    %30 = vector.load %arg8[%c0_17, %c0_18] : memref<4x32xbf16, #tpu.memory_space<vmem>>, vector<4x32xbf16>
    %cst_19 = arith.constant dense<0.000000e+00> : vector<128x4xf32>
    %31 = tpu.matmul %29, %30, %cst_19 {dimension_numbers = #tpu.dot_dimension_numbers<[1], [1], [0], [0], [0, 0, 1, 0], [], []>} : vector<128x32xbf16>, vector<4x32xbf16>, vector<128x4xf32> -> vector<128x4xf32>
    %32 = vector.shape_cast %31 : vector<128x4xf32> to vector<8x16x4xf32>
    %cst_20 = arith.constant dense<0xFF800000> : vector<8x4xf32>
    %33 = vector.multi_reduction <maximumf>, %32, %cst_20 [1] : vector<8x16x4xf32> to vector<8x4xf32>
    %34 = vector.shape_cast %33 : vector<8x4xf32> to vector<8x1x4xf32>
    %35 = vector.broadcast %34 : vector<8x1x4xf32> to vector<8x16x4xf32>
    %36 = arith.subf %32, %35 : vector<8x16x4xf32>
    %37 = math.exp %36 : vector<8x16x4xf32>
    %cst_21 = arith.constant dense<0.000000e+00> : vector<8x4xf32>
    %38 = vector.multi_reduction <add>, %37, %cst_21 [1] : vector<8x16x4xf32> to vector<8x4xf32>
    %39 = vector.shape_cast %38 : vector<8x4xf32> to vector<8x1x4xf32>
    %40 = tpu.reciprocal %39 {approx = true} : vector<8x1x4xf32> -> vector<8x1x4xf32>
    %41 = vector.broadcast %40 : vector<8x1x4xf32> to vector<8x16x4xf32>
    %42 = arith.mulf %37, %41 : vector<8x16x4xf32>
    %43 = vector.shape_cast %42 : vector<8x16x4xf32> to vector<128x4xf32>
    %44 = arith.truncf %43 : vector<128x4xf32> to vector<128x4xbf16>
    %c0_22 = arith.constant 0 : index
    %c0_23 = arith.constant 0 : index
    %45 = vector.load %arg8[%c0_22, %c0_23] : memref<4x32xbf16, #tpu.memory_space<vmem>>, vector<4x32xbf16>
    %cst_24 = arith.constant dense<0.000000e+00> : vector<128x32xf32>
    %46 = tpu.matmul %44, %45, %cst_24 {dimension_numbers = #tpu.dot_dimension_numbers<[1], [0], [0], [1], [0, 0, 1, 1], [], []>} : vector<128x4xbf16>, vector<4x32xbf16>, vector<128x32xf32> -> vector<128x32xf32>
    %47 = arith.extf %23 : vector<128x32xbf16> to vector<128x32xf32>
    %48 = arith.mulf %46, %47 : vector<128x32xf32>
    %49 = vector.shape_cast %48 : vector<128x32xf32> to vector<8x16x32xf32>
    %cst_25 = arith.constant dense<0.000000e+00> : vector<8x32xf32>
    %50 = vector.multi_reduction <add>, %49, %cst_25 [1] : vector<8x16x32xf32> to vector<8x32xf32>
    %51 = arith.truncf %50 : vector<8x32xf32> to vector<8x32xbf16>
    %c0_26 = arith.constant 0 : index
    %c0_27 = arith.constant 0 : index
    %52 = vector.load %arg9[%c0_26, %c0_27] : memref<32x32xbf16, #tpu.memory_space<vmem>>, vector<32x32xbf16>
    %cst_28 = arith.constant dense<0.000000e+00> : vector<8x32xf32>
    %53 = tpu.matmul %51, %52, %cst_28 {dimension_numbers = #tpu.dot_dimension_numbers<[1], [0], [0], [1], [0, 0, 1, 1], [], []>} : vector<8x32xbf16>, vector<32x32xbf16>, vector<8x32xf32> -> vector<8x32xf32>
    %c0_29 = arith.constant 0 : index
    %c0_30 = arith.constant 0 : index
    %54 = vector.load %arg10[%c0_29, %c0_30] : memref<1x32xf32, #tpu.memory_space<vmem>>, vector<1x32xf32>
    %55 = vector.broadcast %54 : vector<1x32xf32> to vector<8x32xf32>
    %56 = arith.addf %53, %55 : vector<8x32xf32>
    %57 = arith.truncf %56 : vector<8x32xf32> to vector<8x32xbf16>
    %c0_31 = arith.constant 0 : index
    %c0_32 = arith.constant 0 : index
    %58 = vector.load %arg11[%c0_31, %c0_32] : memref<32x128xbf16, #tpu.memory_space<vmem>>, vector<32x128xbf16>
    %cst_33 = arith.constant dense<0.000000e+00> : vector<8x128xf32>
    %59 = tpu.matmul %57, %58, %cst_33 {dimension_numbers = #tpu.dot_dimension_numbers<[1], [0], [0], [1], [0, 0, 1, 1], [], []>} : vector<8x32xbf16>, vector<32x128xbf16>, vector<8x128xf32> -> vector<8x128xf32>
    %c0_34 = arith.constant 0 : index
    %c0_35 = arith.constant 0 : index
    %60 = vector.load %arg12[%c0_34, %c0_35] : memref<1x128xf32, #tpu.memory_space<vmem>>, vector<1x128xf32>
    %61 = vector.broadcast %60 : vector<1x128xf32> to vector<8x128xf32>
    %62 = arith.addf %59, %61 : vector<8x128xf32>
    %c0_36 = arith.constant 0 : index
    %c0_37 = arith.constant 0 : index
    %63 = vector.load %arg13[%c0_36, %c0_37] : memref<8x128xf32, #tpu.memory_space<vmem>>, vector<8x128xf32>
    tpu.vector_store %arg13[%c0_36, %c0_37], %62 {strides = array<i32>} : memref<8x128xf32, #tpu.memory_space<vmem>>, vector<8x128xf32>,
    %cst_38 = arith.constant dense<0.000000e+00> : vector<8x16xf32>
    %64 = vector.multi_reduction <add>, %42, %cst_38 [2] : vector<8x16x4xf32> to vector<8x16xf32>
    %cst_39 = arith.constant 2.500000e-01 : f32
    %65 = vector.broadcast %cst_39 : f32 to vector<8x16xf32>
    %66 = arith.mulf %64, %65 : vector<8x16xf32>
    %cst_40 = arith.constant 0.000000e+00 : f32
    %67 = vector.broadcast %cst_40 : f32 to vector<8x112xf32>
    %68 = tpu.concatenate %66, %67 in 1 : vector<8x16xf32>, vector<8x112xf32> -> vector<8x128xf32>
    %c0_41 = arith.constant 0 : index
    %c0_42 = arith.constant 0 : index
    %69 = vector.load %arg14[%c0_41, %c0_42] : memref<8x128xf32, #tpu.memory_space<vmem>>, vector<8x128xf32>
    tpu.vector_store %arg14[%c0_41, %c0_42], %68 {strides = array<i32>} : memref<8x128xf32, #tpu.memory_space<vmem>>, vector<8x128xf32>,
    return
  }
  func.func @transform_0(%arg0: i32) -> (i32, i32, i32) {
    %c0_i32 = arith.constant 0 : i32
    %c0_i32_0 = arith.constant 0 : i32
    %c0_i32_1 = arith.constant 0 : i32
    return %arg0, %c0_i32, %c0_i32_0 : i32, i32, i32
  }
  func.func @transform_1(%arg0: i32) -> (i32, i32) {
    %c0_i32 = arith.constant 0 : i32
    %c0_i32_0 = arith.constant 0 : i32
    %c0_i32_1 = arith.constant 0 : i32
    return %c0_i32, %c0_i32_0 : i32, i32
  }
  func.func @transform_2(%arg0: i32) -> (i32, i32) {
    %c0_i32 = arith.constant 0 : i32
    %c0_i32_0 = arith.constant 0 : i32
    %c0_i32_1 = arith.constant 0 : i32
    return %c0_i32, %c0_i32_0 : i32, i32
  }
  func.func @transform_3(%arg0: i32) -> (i32, i32) {
    %c0_i32 = arith.constant 0 : i32
    %c0_i32_0 = arith.constant 0 : i32
    %c0_i32_1 = arith.constant 0 : i32
    return %c0_i32, %c0_i32_0 : i32, i32
  }
  func.func @transform_4(%arg0: i32) -> (i32, i32) {
    %c0_i32 = arith.constant 0 : i32
    %c0_i32_0 = arith.constant 0 : i32
    %c0_i32_1 = arith.constant 0 : i32
    return %c0_i32, %c0_i32_0 : i32, i32
  }
  func.func @transform_5(%arg0: i32) -> (i32, i32) {
    %c0_i32 = arith.constant 0 : i32
    %c0_i32_0 = arith.constant 0 : i32
    %c0_i32_1 = arith.constant 0 : i32
    return %c0_i32, %c0_i32_0 : i32, i32
  }
  func.func @transform_6(%arg0: i32) -> (i32, i32) {
    %c0_i32 = arith.constant 0 : i32
    %c0_i32_0 = arith.constant 0 : i32
    %c0_i32_1 = arith.constant 0 : i32
    return %c0_i32, %c0_i32_0 : i32, i32
  }
  func.func @transform_7(%arg0: i32) -> (i32, i32) {
    %c0_i32 = arith.constant 0 : i32
    %c0_i32_0 = arith.constant 0 : i32
    %c0_i32_1 = arith.constant 0 : i32
    return %c0_i32, %c0_i32_0 : i32, i32
  }
  func.func @transform_8(%arg0: i32) -> (i32, i32) {
    %c0_i32 = arith.constant 0 : i32
    %c0_i32_0 = arith.constant 0 : i32
    %c0_i32_1 = arith.constant 0 : i32
    return %c0_i32, %c0_i32_0 : i32, i32
  }
  func.func @transform_9(%arg0: i32) -> (i32, i32) {
    %c0_i32 = arith.constant 0 : i32
    %c0_i32_0 = arith.constant 0 : i32
    %c0_i32_1 = arith.constant 0 : i32
    return %c0_i32, %c0_i32_0 : i32, i32
  }
  func.func @transform_10(%arg0: i32) -> (i32, i32) {
    %c0_i32 = arith.constant 0 : i32
    %c0_i32_0 = arith.constant 0 : i32
    %c0_i32_1 = arith.constant 0 : i32
    return %c0_i32, %c0_i32_0 : i32, i32
  }
  func.func @transform_11(%arg0: i32) -> (i32, i32) {
    %c0_i32 = arith.constant 0 : i32
    %c0_i32_0 = arith.constant 0 : i32
    %c0_i32_1 = arith.constant 0 : i32
    return %c0_i32, %c0_i32_0 : i32, i32
  }
  func.func @transform_12(%arg0: i32) -> (i32, i32) {
    %c0_i32 = arith.constant 0 : i32
    %c0_i32_0 = arith.constant 0 : i32
    return %arg0, %c0_i32 : i32, i32
  }
  func.func @transform_13(%arg0: i32) -> (i32, i32) {
    %c0_i32 = arith.constant 0 : i32
    %c0_i32_0 = arith.constant 0 : i32
    return %arg0, %c0_i32 : i32, i32
  }
}

</mosaic_0001>

<llo_original>
// kernel: tpu_custom_call.1
$region0: #{tpu_custom_call.1}
  #allocation0 [shape = 'u32[]', space=smem, size = 0x4, offset = 0x4, fixed_abs, tag = 'smem constant byte address 0x4 - core index']
  #allocation1 [shape = 'u32[144,128]{1,0:T(1,128)}', space=vmem, size = 0x12000, scoped, tag = 'internal scratch']
  %s0 = inlined_call_operand.hbm [shape: bf16[16,16,32], index: 0, kind: input, shape index: {}]
  %s1 = inlined_call_operand.hbm [shape: bf16[32,32], index: 1, kind: input, shape index: {}]
  %s2 = inlined_call_operand.hbm [shape: f32[1,32], index: 2, kind: input, shape index: {}]
  %s3 = inlined_call_operand.hbm [shape: bf16[32,32], index: 3, kind: input, shape index: {}]
  %s4 = inlined_call_operand.hbm [shape: f32[1,32], index: 4, kind: input, shape index: {}]
  %s5 = inlined_call_operand.vmem [shape: bf16[32,32], index: 5, kind: input, shape index: {}]
  %s6 = inlined_call_operand.hbm [shape: f32[1,32], index: 6, kind: input, shape index: {}]
  %s7 = inlined_call_operand.vmem [shape: bf16[4,32], index: 7, kind: input, shape index: {}]
  %s8 = inlined_call_operand.hbm [shape: bf16[32,32], index: 8, kind: input, shape index: {}]
  %s9 = inlined_call_operand.hbm [shape: f32[1,32], index: 9, kind: input, shape index: {}]
  %s10 = inlined_call_operand.vmem [shape: bf16[32,128], index: 10, kind: input, shape index: {}]
  %s11 = inlined_call_operand.vmem [shape: f32[1,128], index: 11, kind: input, shape index: {}]
  %s12 = inlined_call_operand.hbm [shape: f32[16,128], index: 12, kind: output, shape index: {0}]
  %s13 = inlined_call_operand.hbm [shape: f32[16,128], index: 13, kind: output, shape index: {1}]
  %14 = xla_tuple %s12, %s13
  %s15 = sld [smem:[#allocation0]]
  $region121: #{tpu_custom_call.1} parent=0
    _
  %s17 = ssub.s32 1, %s15
  %s18 = scalar_select 0, %s17, %s15
  $region1: #{tpu_custom_call.1} parent=0
    #allocation2 [shape = 'u8[65536]{0}', space=vmem, size = 0x10000, scoped, tag = 'input window, operand 0']
    #allocation3 [shape = 's32[2]{0}', space=sflag, size = 0x8, scoped, tag = 'scoped memory for tpu_custom_call.1']
    #allocation4 [shape = 's32[2]{0}', space=sflag, size = 0x8, scoped, tag = 'scoped memory for tpu_custom_call.1']
    #allocation5 [shape = 'u8[8192]{0}', space=vmem, size = 0x2000, scoped, tag = 'input window, operand 1, single buffered']
    #allocation6 [shape = 's32[1]{0}', space=sflag, size = 0x4, scoped, tag = 'scoped memory for tpu_custom_call.1']
    #allocation7 [shape = 'u8[512]{0}', space=vmem, size = 0x400, scoped, tag = 'input window, operand 2, single buffered']
    #allocation8 [shape = 'u8[8192]{0}', space=vmem, size = 0x2000, scoped, tag = 'input window, operand 3, single buffered']
    #allocation9 [shape = 's32[1]{0}', space=sflag, size = 0x4, scoped, tag = 'scoped memory for tpu_custom_call.1']
    #allocation10 [shape = 'u8[512]{0}', space=vmem, size = 0x400, scoped, tag = 'input window, operand 4, single buffered']
    #allocation11 [shape = 'u8[512]{0}', space=vmem, size = 0x400, scoped, tag = 'input window, operand 6, single buffered']
    #allocation12 [shape = 's32[1]{0}', space=sflag, size = 0x4, scoped, tag = 'scoped memory for tpu_custom_call.1']
    #allocation13 [shape = 'u8[8192]{0}', space=vmem, size = 0x2000, scoped, tag = 'input window, operand 8, single buffered']
    #allocation14 [shape = 'u8[512]{0}', space=vmem, size = 0x400, scoped, tag = 'input window, operand 9, single buffered']
    #allocation15 [shape = 's32[1]{0}', space=sflag, size = 0x4, scoped, tag = 'scoped memory for tpu_custom_call.1']
    #allocation16 [shape = 'u8[8192]{0}', space=vmem, size = 0x2000, scoped, tag = 'output window, operand 0']
    #allocation17 [shape = 'u8[8192]{0}', space=vmem, size = 0x2000, scoped, tag = 'output window, operand 1']
    #allocation18 [shape = 's32[2]{0}', space=sflag, size = 0x8, scoped, tag = 'scoped memory for tpu_custom_call.1']
    %19 = vsyncpa [#allocation3], 0
    %s20 = scalar_lea.sflag [#allocation3], 1
    %21 = vsyncpa %s20, 0
    %22 = vsyncpa [#allocation6], 0
    %23 = vsyncpa [#allocation9], 0
    %24 = vsyncpa [#allocation12], 0
    %25 = vsyncpa [#allocation15], 0
    %26 = vsyncpa [#allocation4], 0
    %s27 = scalar_lea.sflag [#allocation4], 1
    %28 = vsyncpa %s27, 0
    %29 = vsyncpa [#allocation18], 0
    %s30 = scalar_lea.sflag [#allocation18], 1
    %31 = vsyncpa %s30, 0
    loop: start=0, step=1, limit=4
    $region2: #{tpu_custom_call.1} parent=1 // loop_pre_header
      _
    $region3: #{tpu_custom_call.1} parent=1 // loop_header
      %s33 = sphi 0, %s37
      %p34 = scmp.ge.s32.totalorder %s33, 4
      %s43 = sphi 0, %s45
      %s46 = sphi 0, %s43
      %s47 = sphi 0, %s46
      %s63 = sphi 0, %s47
      %s67 = sphi 0, %s67
      %s69 = sphi 0, %s67
      %s70 = sphi 0, %s69
      %s84 = sphi 0, %s70
      %s88 = sphi 0, %s88
      %s90 = sphi 0, %s88
      %s91 = sphi 0, %s90
      %s105 = sphi 0, %s91
      %s109 = sphi 0, %s109
      %s111 = sphi 0, %s109
      %s112 = sphi 0, %s111
      %s126 = sphi 0, %s112
      %s130 = sphi 0, %s130
      %s132 = sphi 0, %s130
      %s133 = sphi 0, %s132
      %s147 = sphi 0, %s133
      %s151 = sphi 0, %s151
      %s153 = sphi 0, %s151
      %s154 = sphi 0, %s153
      %s168 = sphi 0, %s154
      %s172 = sphi 0, %s172
      %s174 = sphi 0, %s172
      %s175 = sphi 0, %s174
      %s189 = sphi 0, %s175
      %s193 = sphi 0, %s193
      %s195 = sphi 0, %s193
      %s196 = sphi 0, %s195
      %s210 = sphi 0, %s196
      %s214 = sphi 0, %s214
      %s216 = sphi 0, %s214
      %s217 = sphi 0, %s216
      %s231 = sphi 0, %s217
      %s235 = sphi 0, %s235
      %s237 = sphi 0, %s235
      %s238 = sphi 0, %s237
      %s252 = sphi 0, %s238
      %s256 = sphi 0, %s256
      %s258 = sphi 0, %s256
      %s259 = sphi 0, %s258
      %s273 = sphi 0, %s259
      %s277 = sphi 0, %s277
      %s279 = sphi 0, %s277
      %s280 = sphi 0, %s279
      %s294 = sphi 0, %s280
      %s300 = sphi 0, %s302
      %s303 = sphi 0, %s300
      %s304 = sphi 0, %s303
      %s320 = sphi 0, %s304
      %s326 = sphi 0, %s328
      %s329 = sphi 0, %s326
      %s330 = sphi 0, %s329
      %s346 = sphi 0, %s330
    $region4: #{tpu_custom_call.1} parent=1 // loop_header_branch
      %36 = sbr.rel (%p34) target = $region8
    $region5: #{tpu_custom_call.1} parent=1 // loop_body
      %s38 = ssub.s32 %s33, 1
      %s39 = ssub.s32 %s33, 2
      %s40 = sadd.s32 %s33, 1
      %s41 = ssub.s32 %s33, %s40
      %p42 = scmp.eq.s32.totalorder %s41, 0
      %s44 = sadd.s32 %s43, 1
      %s45 = scalar_select %p42, %s43, %s44
      %p48 = pneg %p42
      %p49 = scmp.eq.s32.totalorder %s33, 1
      %p50 = por %p48, %p49
      %p51 = scmp.ne.s32.totalorder %s43, %s46
      %p52 = scmp.eq.s32.totalorder %s33, 0
      %p53 = por %p51, %p52
      %p54 = scmp.ne.s32.totalorder %s43, %s46
      %p55 = scmp.eq.s32.totalorder %s38, 1
      %p56 = por %p54, %p55
      %p57 = scmp.ne.s32.totalorder %s46, %s47
      %p58 = scmp.eq.s32.totalorder %s38, 0
      %p59 = por %p57, %p58
      %p60 = scmp.ne.s32.totalorder %s46, %s47
      %p61 = scmp.eq.s32.totalorder %s39, 1
      %p62 = por %p60, %p61
      %p64 = scmp.ne.s32.totalorder %s47, %s63
      %p65 = scmp.eq.s32.totalorder %s39, 0
      %p66 = por %p64, %p65
      %s68 = sadd.s32 %s67, 1
      %p71 = scmp.eq.s32.totalorder %s33, 1
      %p72 = scmp.ne.s32.totalorder %s67, %s69
      %p73 = scmp.eq.s32.totalorder %s33, 0
      %p74 = por %p72, %p73
      %p75 = scmp.ne.s32.totalorder %s67, %s69
      %p76 = scmp.eq.s32.totalorder %s38, 1
      %p77 = por %p75, %p76
      %p78 = scmp.ne.s32.totalorder %s69, %s70
      %p79 = scmp.eq.s32.totalorder %s38, 0
      %p80 = por %p78, %p79
      %p81 = scmp.ne.s32.totalorder %s69, %s70
      %p82 = scmp.eq.s32.totalorder %s39, 1
      %p83 = por %p81, %p82
      %p85 = scmp.ne.s32.totalorder %s70, %s84
      %p86 = scmp.eq.s32.totalorder %s39, 0
      %p87 = por %p85, %p86
      %s89 = sadd.s32 %s88, 1
      %p92 = scmp.eq.s32.totalorder %s33, 1
      %p93 = scmp.ne.s32.totalorder %s88, %s90
      %p94 = scmp.eq.s32.totalorder %s33, 0
      %p95 = por %p93, %p94
      %p96 = scmp.ne.s32.totalorder %s88, %s90
      %p97 = scmp.eq.s32.totalorder %s38, 1
      %p98 = por %p96, %p97
      %p99 = scmp.ne.s32.totalorder %s90, %s91
      %p100 = scmp.eq.s32.totalorder %s38, 0
      %p101 = por %p99, %p100
      %p102 = scmp.ne.s32.totalorder %s90, %s91
      %p103 = scmp.eq.s32.totalorder %s39, 1
      %p104 = por %p102, %p103
      %p106 = scmp.ne.s32.totalorder %s91, %s105
      %p107 = scmp.eq.s32.totalorder %s39, 0
      %p108 = por %p106, %p107
      %s110 = sadd.s32 %s109, 1
      %p113 = scmp.eq.s32.totalorder %s33, 1
      %p114 = scmp.ne.s32.totalorder %s109, %s111
      %p115 = scmp.eq.s32.totalorder %s33, 0
      %p116 = por %p114, %p115
      %p117 = scmp.ne.s32.totalorder %s109, %s111
      %p118 = scmp.eq.s32.totalorder %s38, 1
      %p119 = por %p117, %p118
      %p120 = scmp.ne.s32.totalorder %s111, %s112
      %p121 = scmp.eq.s32.totalorder %s38, 0
      %p122 = por %p120, %p121
      %p123 = scmp.ne.s32.totalorder %s111, %s112
      %p124 = scmp.eq.s32.totalorder %s39, 1
      %p125 = por %p123, %p124
      %p127 = scmp.ne.s32.totalorder %s112, %s126
      %p128 = scmp.eq.s32.totalorder %s39, 0
      %p129 = por %p127, %p128
      %s131 = sadd.s32 %s130, 1
      %p134 = scmp.eq.s32.totalorder %s33, 1
      %p135 = scmp.ne.s32.totalorder %s130, %s132
      %p136 = scmp.eq.s32.totalorder %s33, 0
      %p137 = por %p135, %p136
      %p138 = scmp.ne.s32.totalorder %s130, %s132
      %p139 = scmp.eq.s32.totalorder %s38, 1
      %p140 = por %p138, %p139
      %p141 = scmp.ne.s32.totalorder %s132, %s133
      %p142 = scmp.eq.s32.totalorder %s38, 0
      %p143 = por %p141, %p142
      %p144 = scmp.ne.s32.totalorder %s132, %s133
      %p145 = scmp.eq.s32.totalorder %s39, 1
      %p146 = por %p144, %p145
      %p148 = scmp.ne.s32.totalorder %s133, %s147
      %p149 = scmp.eq.s32.totalorder %s39, 0
      %p150 = por %p148, %p149
      %s152 = sadd.s32 %s151, 1
      %p155 = scmp.eq.s32.totalorder %s33, 1
      %p156 = scmp.ne.s32.totalorder %s151, %s153
      %p157 = scmp.eq.s32.totalorder %s33, 0
      %p158 = por %p156, %p157
      %p159 = scmp.ne.s32.totalorder %s151, %s153
      %p160 = scmp.eq.s32.totalorder %s38, 1
      %p161 = por %p159, %p160
      %p162 = scmp.ne.s32.totalorder %s153, %s154
      %p163 = scmp.eq.s32.totalorder %s38, 0
      %p164 = por %p162, %p163
      %p165 = scmp.ne.s32.totalorder %s153, %s154
      %p166 = scmp.eq.s32.totalorder %s39, 1
      %p167 = por %p165, %p166
      %p169 = scmp.ne.s32.totalorder %s154, %s168
      %p170 = scmp.eq.s32.totalorder %s39, 0
      %p171 = por %p169, %p170
      %s173 = sadd.s32 %s172, 1
      %p176 = scmp.eq.s32.totalorder %s33, 1
      %p177 = scmp.ne.s32.totalorder %s172, %s174
      %p178 = scmp.eq.s32.totalorder %s33, 0
      %p179 = por %p177, %p178
      %p180 = scmp.ne.s32.totalorder %s172, %s174
      %p181 = scmp.eq.s32.totalorder %s38, 1
      %p182 = por %p180, %p181
      %p183 = scmp.ne.s32.totalorder %s174, %s175
      %p184 = scmp.eq.s32.totalorder %s38, 0
      %p185 = por %p183, %p184
      %p186 = scmp.ne.s32.totalorder %s174, %s175
      %p187 = scmp.eq.s32.totalorder %s39, 1
      %p188 = por %p186, %p187
      %p190 = scmp.ne.s32.totalorder %s175, %s189
      %p191 = scmp.eq.s32.totalorder %s39, 0
      %p192 = por %p190, %p191
      %s194 = sadd.s32 %s193, 1
      %p197 = scmp.eq.s32.totalorder %s33, 1
      %p198 = scmp.ne.s32.totalorder %s193, %s195
      %p199 = scmp.eq.s32.totalorder %s33, 0
      %p200 = por %p198, %p199
      %p201 = scmp.ne.s32.totalorder %s193, %s195
      %p202 = scmp.eq.s32.totalorder %s38, 1
      %p203 = por %p201, %p202
      %p204 = scmp.ne.s32.totalorder %s195, %s196
      %p205 = scmp.eq.s32.totalorder %s38, 0
      %p206 = por %p204, %p205
      %p207 = scmp.ne.s32.totalorder %s195, %s196
      %p208 = scmp.eq.s32.totalorder %s39, 1
      %p209 = por %p207, %p208
      %p211 = scmp.ne.s32.totalorder %s196, %s210
      %p212 = scmp.eq.s32.totalorder %s39, 0
      %p213 = por %p211, %p212
      %s215 = sadd.s32 %s214, 1
      %p218 = scmp.eq.s32.totalorder %s33, 1
      %p219 = scmp.ne.s32.totalorder %s214, %s216
      %p220 = scmp.eq.s32.totalorder %s33, 0
      %p221 = por %p219, %p220
      %p222 = scmp.ne.s32.totalorder %s214, %s216
      %p223 = scmp.eq.s32.totalorder %s38, 1
      %p224 = por %p222, %p223
      %p225 = scmp.ne.s32.totalorder %s216, %s217
      %p226 = scmp.eq.s32.totalorder %s38, 0
      %p227 = por %p225, %p226
      %p228 = scmp.ne.s32.totalorder %s216, %s217
      %p229 = scmp.eq.s32.totalorder %s39, 1
      %p230 = por %p228, %p229
      %p232 = scmp.ne.s32.totalorder %s217, %s231
      %p233 = scmp.eq.s32.totalorder %s39, 0
      %p234 = por %p232, %p233
      %s236 = sadd.s32 %s235, 1
      %p239 = scmp.eq.s32.totalorder %s33, 1
      %p240 = scmp.ne.s32.totalorder %s235, %s237
      %p241 = scmp.eq.s32.totalorder %s33, 0
      %p242 = por %p240, %p241
      %p243 = scmp.ne.s32.totalorder %s235, %s237
      %p244 = scmp.eq.s32.totalorder %s38, 1
      %p245 = por %p243, %p244
      %p246 = scmp.ne.s32.totalorder %s237, %s238
      %p247 = scmp.eq.s32.totalorder %s38, 0
      %p248 = por %p246, %p247
      %p249 = scmp.ne.s32.totalorder %s237, %s238
      %p250 = scmp.eq.s32.totalorder %s39, 1
      %p251 = por %p249, %p250
      %p253 = scmp.ne.s32.totalorder %s238, %s252
      %p254 = scmp.eq.s32.totalorder %s39, 0
      %p255 = por %p253, %p254
      %s257 = sadd.s32 %s256, 1
      %p260 = scmp.eq.s32.totalorder %s33, 1
      %p261 = scmp.ne.s32.totalorder %s256, %s258
      %p262 = scmp.eq.s32.totalorder %s33, 0
      %p263 = por %p261, %p262
      %p264 = scmp.ne.s32.totalorder %s256, %s258
      %p265 = scmp.eq.s32.totalorder %s38, 1
      %p266 = por %p264, %p265
      %p267 = scmp.ne.s32.totalorder %s258, %s259
      %p268 = scmp.eq.s32.totalorder %s38, 0
      %p269 = por %p267, %p268
      %p270 = scmp.ne.s32.totalorder %s258, %s259
      %p271 = scmp.eq.s32.totalorder %s39, 1
      %p272 = por %p270, %p271
      %p274 = scmp.ne.s32.totalorder %s259, %s273
      %p275 = scmp.eq.s32.totalorder %s39, 0
      %p276 = por %p274, %p275
      %s278 = sadd.s32 %s277, 1
      %p281 = scmp.eq.s32.totalorder %s33, 1
      %p282 = scmp.ne.s32.totalorder %s277, %s279
      %p283 = scmp.eq.s32.totalorder %s33, 0
      %p284 = por %p282, %p283
      %p285 = scmp.ne.s32.totalorder %s277, %s279
      %p286 = scmp.eq.s32.totalorder %s38, 1
      %p287 = por %p285, %p286
      %p288 = scmp.ne.s32.totalorder %s279, %s280
      %p289 = scmp.eq.s32.totalorder %s38, 0
      %p290 = por %p288, %p289
      %p291 = scmp.ne.s32.totalorder %s279, %s280
      %p292 = scmp.eq.s32.totalorder %s39, 1
      %p293 = por %p291, %p292
      %p295 = scmp.ne.s32.totalorder %s280, %s294
      %p296 = scmp.eq.s32.totalorder %s39, 0
      %p297 = por %p295, %p296
      %s298 = ssub.s32 %s33, %s40
      %p299 = scmp.eq.s32.totalorder %s298, 0
      %s301 = sadd.s32 %s300, 1
      %s302 = scalar_select %p299, %s300, %s301
      %p305 = pneg %p299
      %p306 = scmp.eq.s32.totalorder %s33, 1
      %p307 = por %p305, %p306
      %p308 = scmp.ne.s32.totalorder %s300, %s303
      %p309 = scmp.eq.s32.totalorder %s33, 0
      %p310 = por %p308, %p309
      %p311 = scmp.ne.s32.totalorder %s300, %s303
      %p312 = scmp.eq.s32.totalorder %s38, 1
      %p313 = por %p311, %p312
      %p314 = scmp.ne.s32.totalorder %s303, %s304
      %p315 = scmp.eq.s32.totalorder %s38, 0
      %p316 = por %p314, %p315
      %p317 = scmp.ne.s32.totalorder %s303, %s304
      %p318 = scmp.eq.s32.totalorder %s39, 1
      %p319 = por %p317, %p318
      %p321 = scmp.ne.s32.totalorder %s304, %s320
      %p322 = scmp.eq.s32.totalorder %s39, 0
      %p323 = por %p321, %p322
      %s324 = ssub.s32 %s33, %s40
      %p325 = scmp.eq.s32.totalorder %s324, 0
      %s327 = sadd.s32 %s326, 1
      %s328 = scalar_select %p325, %s326, %s327
      %p331 = pneg %p325
      %p332 = scmp.eq.s32.totalorder %s33, 1
      %p333 = por %p331, %p332
      %p334 = scmp.ne.s32.totalorder %s326, %s329
      %p335 = scmp.eq.s32.totalorder %s33, 0
      %p336 = por %p334, %p335
      %p337 = scmp.ne.s32.totalorder %s326, %s329
      %p338 = scmp.eq.s32.totalorder %s38, 1
      %p339 = por %p337, %p338
      %p340 = scmp.ne.s32.totalorder %s329, %s330
      %p341 = scmp.eq.s32.totalorder %s38, 0
      %p342 = por %p340, %p341
      %p343 = scmp.ne.s32.totalorder %s329, %s330
      %p344 = scmp.eq.s32.totalorder %s39, 1
      %p345 = por %p343, %p344
      %p347 = scmp.ne.s32.totalorder %s330, %s346
      %p348 = scmp.eq.s32.totalorder %s39, 0
      %p349 = por %p347, %p348
      %p350 = scmp.le.s32.totalorder 1, %s33
      %p351 = scmp.lt.s32.totalorder %s33, 3
      %p352 = pnand %p350, %p351
      %p353 = pneg %p352
      // Predicated region
      $region9: #{tpu_custom_call.1} parent=5 // pred_check
        _
      $region10: #{tpu_custom_call.1} parent=5 // pred_check_branch
        %355 = sbr.rel (%p352) target = $region12
      $region11: #{tpu_custom_call.1} parent=5 // pred_region
        %s356 = ssub.s32 %s33, 1
        // Predicated region
        $region13: #{tpu_custom_call.1} parent=11 // pred_check
          %p357 = pneg %p80
        $region14: #{tpu_custom_call.1} parent=11 // pred_check_branch
          %359 = sbr.rel (%p357) target = $region16
        $region15: #{tpu_custom_call.1} parent=11 // pred_region
          %s361 = ssub.s32 256, 256
          %362 = vsyncadd [#allocation6], %s361
          %s363 = sshll.u32 [#allocation5], 4
          %s364 = int_to_ptr.vmem [resolvable:$true] %s363
          %369 = dma.hbm_to_vmem [thread:$0]  %s1, 256, %s364, [#allocation6], 64, 64, 4
        $region16: #{tpu_custom_call.1} parent=11 // pred_fallthru
          _
        // Predicated region
        $region17: #{tpu_custom_call.1} parent=11 // pred_check
          %p370 = pneg %p101
        $region18: #{tpu_custom_call.1} parent=11 // pred_check_branch
          %372 = sbr.rel (%p370) target = $region20
        $region19: #{tpu_custom_call.1} parent=11 // pred_region
          %s374 = ssub.s32 16, 16
          %375 = vsyncadd [#allocation6], %s374
          %s377 = sshll.u32 [#allocation7], 4
          %s378 = int_to_ptr.vmem [resolvable:$true] %s377
          %380 = dma.hbm_to_vmem [thread:$0]  %s2, 16, %s378, [#allocation6]
        $region20: #{tpu_custom_call.1} parent=11 // pred_fallthru
          _
        // Predicated region
        $region21: #{tpu_custom_call.1} parent=11 // pred_check
          %p381 = pneg %p122
        $region22: #{tpu_custom_call.1} parent=11 // pred_check_branch
          %383 = sbr.rel (%p381) target = $region24
        $region23: #{tpu_custom_call.1} parent=11 // pred_region
          %s385 = ssub.s32 256, 256
          %386 = vsyncadd [#allocation9], %s385
          %s387 = sshll.u32 [#allocation8], 4
          %s388 = int_to_ptr.vmem [resolvable:$true] %s387
          %393 = dma.hbm_to_vmem [thread:$0]  %s3, 256, %s388, [#allocation9], 64, 64, 4
        $region24: #{tpu_custom_call.1} parent=11 // pred_fallthru
          _
        // Predicated region
        $region25: #{tpu_custom_call.1} parent=11 // pred_check
          %p394 = pneg %p143
        $region26: #{tpu_custom_call.1} parent=11 // pred_check_branch
          %396 = sbr.rel (%p394) target = $region28
        $region27: #{tpu_custom_call.1} parent=11 // pred_region
          %s398 = ssub.s32 16, 16
          %399 = vsyncadd [#allocation9], %s398
          %s401 = sshll.u32 [#allocation10], 4
          %s402 = int_to_ptr.vmem [resolvable:$true] %s401
          %404 = dma.hbm_to_vmem [thread:$0]  %s4, 16, %s402, [#allocation9]
        $region28: #{tpu_custom_call.1} parent=11 // pred_fallthru
          _
        // Predicated region
        $region29: #{tpu_custom_call.1} parent=11 // pred_check
          %p405 = pneg %p164
        $region30: #{tpu_custom_call.1} parent=11 // pred_check_branch
          %407 = sbr.rel (%p405) target = $region32
        $region31: #{tpu_custom_call.1} parent=11 // pred_region
          _
        $region32: #{tpu_custom_call.1} parent=11 // pred_fallthru
          _
        // Predicated region
        $region33: #{tpu_custom_call.1} parent=11 // pred_check
          %p408 = pneg %p185
        $region34: #{tpu_custom_call.1} parent=11 // pred_check_branch
          %410 = sbr.rel (%p408) target = $region36
        $region35: #{tpu_custom_call.1} parent=11 // pred_region
          %s412 = ssub.s32 16, 16
          %413 = vsyncadd [#allocation12], %s412
          %s415 = sshll.u32 [#allocation11], 4
          %s416 = int_to_ptr.vmem [resolvable:$true] %s415
          %418 = dma.hbm_to_vmem [thread:$0]  %s6, 16, %s416, [#allocation12]
        $region36: #{tpu_custom_call.1} parent=11 // pred_fallthru
          _
        // Predicated region
        $region37: #{tpu_custom_call.1} parent=11 // pred_check
          %p419 = pneg %p206
        $region38: #{tpu_custom_call.1} parent=11 // pred_check_branch
          %421 = sbr.rel (%p419) target = $region40
        $region39: #{tpu_custom_call.1} parent=11 // pred_region
          _
        $region40: #{tpu_custom_call.1} parent=11 // pred_fallthru
          _
        // Predicated region
        $region41: #{tpu_custom_call.1} parent=11 // pred_check
          %p422 = pneg %p227
        $region42: #{tpu_custom_call.1} parent=11 // pred_check_branch
          %424 = sbr.rel (%p422) target = $region44
        $region43: #{tpu_custom_call.1} parent=11 // pred_region
          %s426 = ssub.s32 256, 256
          %427 = vsyncadd [#allocation12], %s426
          %s428 = sshll.u32 [#allocation13], 4
          %s429 = int_to_ptr.vmem [resolvable:$true] %s428
          %434 = dma.hbm_to_vmem [thread:$0]  %s8, 256, %s429, [#allocation12], 64, 64, 4
        $region44: #{tpu_custom_call.1} parent=11 // pred_fallthru
          _
        // Predicated region
        $region45: #{tpu_custom_call.1} parent=11 // pred_check
          %p435 = pneg %p248
        $region46: #{tpu_custom_call.1} parent=11 // pred_check_branch
          %437 = sbr.rel (%p435) target = $region48
        $region47: #{tpu_custom_call.1} parent=11 // pred_region
          %s439 = ssub.s32 16, 16
          %440 = vsyncadd [#allocation15], %s439
          %s442 = sshll.u32 [#allocation14], 4
          %s443 = int_to_ptr.vmem [resolvable:$true] %s442
          %445 = dma.hbm_to_vmem [thread:$0]  %s9, 16, %s443, [#allocation15]
        $region48: #{tpu_custom_call.1} parent=11 // pred_fallthru
          _
        // Predicated region
        $region49: #{tpu_custom_call.1} parent=11 // pred_check
          %p446 = pneg %p269
        $region50: #{tpu_custom_call.1} parent=11 // pred_check_branch
          %448 = sbr.rel (%p446) target = $region52
        $region51: #{tpu_custom_call.1} parent=11 // pred_region
          _
        $region52: #{tpu_custom_call.1} parent=11 // pred_fallthru
          _
        // Predicated region
        $region53: #{tpu_custom_call.1} parent=11 // pred_check
          %p449 = pneg %p290
        $region54: #{tpu_custom_call.1} parent=11 // pred_check_branch
          %451 = sbr.rel (%p449) target = $region56
        $region55: #{tpu_custom_call.1} parent=11 // pred_region
          _
        $region56: #{tpu_custom_call.1} parent=11 // pred_fallthru
          _
      $region12: #{tpu_custom_call.1} parent=5 // pred_fallthru
        _
      %p452 = scmp.lt.s32.totalorder %s33, 2
      // Predicated region
      $region57: #{tpu_custom_call.1} parent=5 // pred_check
        %p453 = pneg %p452
      $region58: #{tpu_custom_call.1} parent=5 // pred_check_branch
        %455 = sbr.rel (%p453) target = $region60
      $region59: #{tpu_custom_call.1} parent=5 // pred_region
        // Predicated region
        $region61: #{tpu_custom_call.1} parent=59 // pred_check
          %p456 = pneg %p53
        $region62: #{tpu_custom_call.1} parent=59 // pred_check_branch
          %458 = sbr.rel (%p456) target = $region64
        $region63: #{tpu_custom_call.1} parent=59 // pred_region
          %s459 = sand.u32 %s43, 1
          %s460 = scalar_lea.sflag [#allocation3], %s459
          %s461 = sand.u32 %s43, 1
          %s462 = smul.addr %s461, 64
          %s463 = scalar_lea.vmem [#allocation2], %s462
          %s464 = smul.u32 8, %s33
          %s466 = ssub.s32 1024, 1024
          %467 = vsyncadd %s460, %s466
          %s468 = smul.addr %s464, 2
          %s469 = smul.addr %s468, 64
          %s470 = scalar_lea.hbm %s0, %s469
          %s471 = sshll.u32 %s463, 4
          %s472 = int_to_ptr.vmem [resolvable:$true] %s471
          %477 = dma.hbm_to_vmem [thread:$0]  %s470, 1024, %s472, %s460, 64, 64, 4
        $region64: #{tpu_custom_call.1} parent=59 // pred_fallthru
          _
      $region60: #{tpu_custom_call.1} parent=5 // pred_fallthru
        _
      %p478 = scmp.le.s32.totalorder 1, %s33
      %p479 = scmp.lt.s32.totalorder %s33, 3
      %p480 = pnand %p478, %p479
      %p481 = pneg %p480
      // Predicated region
      $region65: #{tpu_custom_call.1} parent=5 // pred_check
        _
      $region66: #{tpu_custom_call.1} parent=5 // pred_check_branch
        %483 = sbr.rel (%p480) target = $region68
      $region67: #{tpu_custom_call.1} parent=5 // pred_region
        %s484 = ssub.s32 %s33, 1
        %s485 = sand.u32 %s46, 1
        %s486 = scalar_lea.sflag [#allocation3], %s485
        %s487 = sand.u32 %s46, 1
        %s488 = smul.addr %s487, 64
        %s489 = scalar_lea.vmem [#allocation2], %s488
        // Predicated region
        $region69: #{tpu_custom_call.1} parent=67 // pred_check
          %p490 = pneg %p59
        $region70: #{tpu_custom_call.1} parent=67 // pred_check_branch
          %492 = sbr.rel (%p490) target = $region72
        $region71: #{tpu_custom_call.1} parent=67 // pred_region
          %493 = dma.done %s486, 1024
        $region72: #{tpu_custom_call.1} parent=67 // pred_fallthru
          _
        // Predicated region
        $region73: #{tpu_custom_call.1} parent=67 // pred_check
          %p494 = pneg %p80
        $region74: #{tpu_custom_call.1} parent=67 // pred_check_branch
          %496 = sbr.rel (%p494) target = $region76
        $region75: #{tpu_custom_call.1} parent=67 // pred_region
          %497 = dma.done [#allocation6], 256
        $region76: #{tpu_custom_call.1} parent=67 // pred_fallthru
          _
        // Predicated region
        $region77: #{tpu_custom_call.1} parent=67 // pred_check
          %p498 = pneg %p101
        $region78: #{tpu_custom_call.1} parent=67 // pred_check_branch
          %500 = sbr.rel (%p498) target = $region80
        $region79: #{tpu_custom_call.1} parent=67 // pred_region
          %501 = dma.done [#allocation6], 16
        $region80: #{tpu_custom_call.1} parent=67 // pred_fallthru
          _
        // Predicated region
        $region81: #{tpu_custom_call.1} parent=67 // pred_check
          %p502 = pneg %p122
        $region82: #{tpu_custom_call.1} parent=67 // pred_check_branch
          %504 = sbr.rel (%p502) target = $region84
        $region83: #{tpu_custom_call.1} parent=67 // pred_region
          %505 = dma.done [#allocation9], 256
        $region84: #{tpu_custom_call.1} parent=67 // pred_fallthru
          _
        // Predicated region
        $region85: #{tpu_custom_call.1} parent=67 // pred_check
          %p506 = pneg %p143
        $region86: #{tpu_custom_call.1} parent=67 // pred_check_branch
          %508 = sbr.rel (%p506) target = $region88
        $region87: #{tpu_custom_call.1} parent=67 // pred_region
          %509 = dma.done [#allocation9], 16
        $region88: #{tpu_custom_call.1} parent=67 // pred_fallthru
          _
        // Predicated region
        $region89: #{tpu_custom_call.1} parent=67 // pred_check
          %p510 = pneg %p185
        $region90: #{tpu_custom_call.1} parent=67 // pred_check_branch
          %512 = sbr.rel (%p510) target = $region92
        $region91: #{tpu_custom_call.1} parent=67 // pred_region
          %513 = dma.done [#allocation12], 16
        $region92: #{tpu_custom_call.1} parent=67 // pred_fallthru
          _
        // Predicated region
        $region93: #{tpu_custom_call.1} parent=67 // pred_check
          %p514 = pneg %p227
        $region94: #{tpu_custom_call.1} parent=67 // pred_check_branch
          %516 = sbr.rel (%p514) target = $region96
        $region95: #{tpu_custom_call.1} parent=67 // pred_region
          %517 = dma.done [#allocation12], 256
        $region96: #{tpu_custom_call.1} parent=67 // pred_fallthru
          _
        // Predicated region
        $region97: #{tpu_custom_call.1} parent=67 // pred_check
          %p518 = pneg %p248
        $region98: #{tpu_custom_call.1} parent=67 // pred_check_branch
          %520 = sbr.rel (%p518) target = $region100
        $region99: #{tpu_custom_call.1} parent=67 // pred_region
          %521 = dma.done [#allocation15], 16
        $region100: #{tpu_custom_call.1} parent=67 // pred_fallthru
          _
        %s522 = sand.u32 %s46, 1
        %s523 = scalar_lea.sflag [#allocation3], %s522
        %s524 = sand.u32 %s46, 1
        %s525 = smul.addr %s524, 64
        %s526 = scalar_lea.vmem [#allocation2], %s525
        %p527 = pneg %p59
        %p528 = pneg %p56
        %p529 = pneg %p80
        %p530 = pneg %p77
        %p531 = pneg %p101
        %p532 = pneg %p98
        %p533 = pneg %p122
        %p534 = pneg %p119
        %p535 = pneg %p143
        %p536 = pneg %p140
        %p537 = pneg %p164
        %p538 = pneg %p161
        %p539 = pneg %p185
        %p540 = pneg %p182
        %p541 = pneg %p206
        %p542 = pneg %p203
        %p543 = pneg %p227
        %p544 = pneg %p224
        %p545 = pneg %p248
        %p546 = pneg %p245
        %p547 = pneg %p269
        %p548 = pneg %p266
        %p549 = pneg %p290
        %p550 = pneg %p287
        %p551 = pneg %p316
        %p552 = pneg %p313
        %s553 = sand.u32 %s303, 1
        %s554 = scalar_lea.sflag [#allocation4], %s553
        %s555 = sand.u32 %s303, 1
        %s556 = smul.addr %s555, 8
        %s557 = scalar_lea.vmem [#allocation16], %s556
        %p558 = pneg %p342
        %p559 = pneg %p339
        %s560 = sand.u32 %s329, 1
        %s561 = scalar_lea.sflag [#allocation18], %s560
        %s562 = sand.u32 %s329, 1
        %s563 = smul.addr %s562, 8
        %s564 = scalar_lea.vmem [#allocation17], %s563
        %s565 = smul.u32 8, %s38
        %v567 = vld [vmem:[%s489] sm:$0xf]
        %v568 = vld [vmem:[%s489 + $0x4] sm:$0xf]
        %v569 = vld [vmem:[%s489 + $0x8] sm:$0xf]
        %v570 = vld [vmem:[%s489 + $0xc] sm:$0xf]
        %v571 = vld [vmem:[%s489 + $0x10] sm:$0xf]
        %v572 = vld [vmem:[%s489 + $0x14] sm:$0xf]
        %v573 = vld [vmem:[%s489 + $0x18] sm:$0xf]
        %v574 = vld [vmem:[%s489 + $0x1c] sm:$0xf]
        %v575 = vld [vmem:[%s489 + $0x20] sm:$0xf]
        %v576 = vld [vmem:[%s489 + $0x24] sm:$0xf]
        %v577 = vld [vmem:[%s489 + $0x28] sm:$0xf]
        %v578 = vld [vmem:[%s489 + $0x2c] sm:$0xf]
        %v579 = vld [vmem:[%s489 + $0x30] sm:$0xf]
        %v580 = vld [vmem:[%s489 + $0x34] sm:$0xf]
        %v581 = vld [vmem:[%s489 + $0x38] sm:$0xf]
        %v582 = vld [vmem:[%s489 + $0x3c] sm:$0xf]
        %v583 = vld [vmem:[#allocation5] sm:$0xf]
        %v584 = vld [vmem:[#allocation5 + $0x4] sm:$0xf]
        %v585 = vld [vmem:[#allocation5 + $0x8] sm:$0xf]
        %v586 = vld [vmem:[#allocation5 + $0xc] sm:$0xf]
        %v587 = vld [vmem:[#allocation7] sm:$0x1]
        %v589 = vlaneseq
        %v590 = vshrl.u32 %v589, 7
        %v591 = vsub.s32 0, %v590
        %v592 = vrot.slane %v587, %v591
        %v602 = vunpack.c.l.b16 %v567
        %v603 = vunpack.c.l.b16 %v569
        %v604 = vunpack.c.l.b16 %v571
        %v605 = vunpack.c.l.b16 %v573
        %v606 = vunpack.c.l.b16 %v575
        %v607 = vunpack.c.l.b16 %v577
        %v608 = vunpack.c.l.b16 %v579
        %v609 = vunpack.c.l.b16 %v581
        %v610 = vpack.c.b16 %v602, %v602
        %v611 = vpack.c.b16 %v603, %v603
        %v612 = vpack.c.b16 %v604, %v604
        %v613 = vpack.c.b16 %v605, %v605
        %v614 = vpack.c.b16 %v606, %v606
        %v615 = vpack.c.b16 %v607, %v607
        %v616 = vpack.c.b16 %v608, %v608
        %v617 = vpack.c.b16 %v609, %v609
        %v618 = vunpack.c.l.b16 %v610
        %v619 = vunpack.c.l.b16 %v611
        %v620 = vunpack.c.l.b16 %v612
        %v621 = vunpack.c.l.b16 %v613
        %v622 = vunpack.c.l.b16 %v614
        %v623 = vunpack.c.l.b16 %v615
        %v624 = vunpack.c.l.b16 %v616
        %v625 = vunpack.c.l.b16 %v617
        %v626 = vrot.slane %v619, 7
        %vm627 = vcmask 1041409
        %v628 = vsel %vm627, %v626, %v618
        %v629 = vrot.slane %v620, 6
        %vm630 = vcmask 1042434
        %v631 = vsel %vm630, %v629, %v628
        %v632 = vrot.slane %v621, 5
        %vm633 = vcmask 1043459
        %v634 = vsel %vm633, %v632, %v631
        %v635 = vrot.slane %v622, 4
        %vm636 = vcmask 1044484
        %v637 = vsel %vm636, %v635, %v634
        %v638 = vrot.slane %v623, 3
        %vm639 = vcmask 1045509
        %v640 = vsel %vm639, %v638, %v637
        %v641 = vrot.slane %v624, 2
        %vm642 = vcmask 1046534
        %v643 = vsel %vm642, %v641, %v640
        %v644 = vrot.slane %v625, 1
        %vm645 = vcmask 1047559
        %v646 = vsel %vm645, %v644, %v643
        %v647 = vpack.c.b16 %v646, %v646
        %v652 = vunpack.c.l.b16 %v583
        %v653 = vunpack.c.l.b16 %v584
        %v654 = vunpack.c.l.b16 %v585
        %v655 = vunpack.c.l.b16 %v586
        %v656 = vpack.c.b16 %v653, %v652
        %v657 = vpack.c.b16 %v655, %v654
        %vm660 = vcmask 261120
        %v662 = vsel %vm660, %v647, 0
        %664 = vmatprep.subr.bf16.mxu0 0
        %665 = vmatpush1.bf16.msra.mxu0 %v656
        %666 = vmatprep.subr.bf16.mxu0 0
        %667 = vmatpush1.bf16.msra.mxu0 %v657
        %668 = vmatprep.subr.bf16.mxu0 0
        %669 = vmatpush1.bf16.msra.mxu0 0
        %670 = vmatprep.subr.bf16.mxu0 0
        %671 = vmatpush1.bf16.msra.mxu0 0
        %672 = vmatprep.subr.bf16.mxu0 0
        %673 = vmatpush1.bf16.msra.mxu0 0
        %674 = vmatprep.subr.bf16.mxu0 0
        %675 = vmatpush1.bf16.msra.mxu0 0
        %676 = vmatprep.subr.bf16.mxu0 0
        %677 = vmatpush1.bf16.msra.mxu0 0
        %678 = vmatprep.subr.bf16.mxu0 0
        %679 = vmatpush1.bf16.msra.mxu0 0
        %680 = vmatprep.subr.bf16.mxu0 0
        %681 = vmatpush1.bf16.msra.mxu0 0
        %682 = vmatprep.subr.bf16.mxu0 0
        %683 = vmatpush1.bf16.msra.mxu0 0
        %684 = vmatprep.subr.bf16.mxu0 0
        %685 = vmatpush1.bf16.msra.mxu0 0
        %686 = vmatprep.subr.bf16.mxu0 0
        %687 = vmatpush1.bf16.msra.mxu0 0
        %688 = vmatprep.subr.bf16.mxu0 0
        %689 = vmatpush1.bf16.msra.mxu0 0
        %690 = vmatprep.subr.bf16.mxu0 0
        %691 = vmatpush1.bf16.msra.mxu0 0
        %692 = vmatprep.subr.bf16.mxu0 0
        %693 = vmatpush1.bf16.msra.mxu0 0
        %694 = vmatprep.subr.bf16.mxu0 0
        %695 = vmatpush1.bf16.msra.mxu0 0
        %696 = vmatprep.mubr.bf16.mxu0 0
        %697 = vmatmul.mubr.bf16.gmra.mrb[0].mxu0 %v662
        %v698 = vpop.f32.mrb[0].mxu0
        %v699 = vadd.f32 %v592, %v698
        %v700 = vpop.f32.mrb[0].mxu0
        %v701 = vpop.f32.mrb[0].mxu0
        %v702 = vpop.f32.mrb[0].mxu0
        %703 = vdwg.mxu0
        %v704 = vmul.f32 %v699, 0.35355338
        %v705 = vld [vmem:[#allocation8] sm:$0xf]
        %v706 = vld [vmem:[#allocation8 + $0x4] sm:$0xf]
        %v707 = vld [vmem:[#allocation8 + $0x8] sm:$0xf]
        %v708 = vld [vmem:[#allocation8 + $0xc] sm:$0xf]
        %v709 = vld [vmem:[#allocation10] sm:$0x1]
        %v711 = vlaneseq
        %v712 = vshrl.u32 %v711, 7
        %v713 = vsub.s32 0, %v712
        %v714 = vrot.slane %v709, %v713
        %v724 = vunpack.c.l.b16 %v568
        %v725 = vunpack.c.l.b16 %v570
        %v726 = vunpack.c.l.b16 %v572
        %v727 = vunpack.c.l.b16 %v574
        %v728 = vunpack.c.l.b16 %v576
        %v729 = vunpack.c.l.b16 %v578
        %v730 = vunpack.c.l.b16 %v580
        %v731 = vunpack.c.l.b16 %v582
        %v732 = vpack.c.b16 %v724, %v602
        %v733 = vpack.c.b16 %v725, %v603
        %v734 = vpack.c.b16 %v726, %v604
        %v735 = vpack.c.b16 %v727, %v605
        %v736 = vpack.c.b16 %v728, %v606
        %v737 = vpack.c.b16 %v729, %v607
        %v738 = vpack.c.b16 %v730, %v608
        %v739 = vpack.c.b16 %v731, %v609
        %v744 = vunpack.c.l.b16 %v705
        %v745 = vunpack.c.l.b16 %v706
        %v746 = vunpack.c.l.b16 %v707
        %v747 = vunpack.c.l.b16 %v708
        %v748 = vpack.c.b16 %v745, %v744
        %v749 = vpack.c.b16 %v747, %v746
        %v753 = vsel %vm660, %v732, 0
        %v756 = vsel %vm660, %v733, 0
        %v759 = vsel %vm660, %v734, 0
        %v762 = vsel %vm660, %v735, 0
        %v765 = vsel %vm660, %v736, 0
        %v768 = vsel %vm660, %v737, 0
        %v771 = vsel %vm660, %v738, 0
        %v774 = vsel %vm660, %v739, 0
        %776 = vmatprep.subr.bf16.mxu0 0
        %777 = vmatpush1.bf16.msra.mxu0 %v748
        %778 = vmatprep.subr.bf16.mxu0 0
        %779 = vmatpush1.bf16.msra.mxu0 %v749
        %780 = vmatprep.subr.bf16.mxu0 0
        %781 = vmatpush1.bf16.msra.mxu0 0
        %782 = vmatprep.subr.bf16.mxu0 0
        %783 = vmatpush1.bf16.msra.mxu0 0
        %784 = vmatprep.subr.bf16.mxu0 0
        %785 = vmatpush1.bf16.msra.mxu0 0
        %786 = vmatprep.subr.bf16.mxu0 0
        %787 = vmatpush1.bf16.msra.mxu0 0
        %788 = vmatprep.subr.bf16.mxu0 0
        %789 = vmatpush1.bf16.msra.mxu0 0
        %790 = vmatprep.subr.bf16.mxu0 0
        %791 = vmatpush1.bf16.msra.mxu0 0
        %792 = vmatprep.subr.bf16.mxu0 0
        %793 = vmatpush1.bf16.msra.mxu0 0
        %794 = vmatprep.subr.bf16.mxu0 0
        %795 = vmatpush1.bf16.msra.mxu0 0
        %796 = vmatprep.subr.bf16.mxu0 0
        %797 = vmatpush1.bf16.msra.mxu0 0
        %798 = vmatprep.subr.bf16.mxu0 0
        %799 = vmatpush1.bf16.msra.mxu0 0
        %800 = vmatprep.subr.bf16.mxu0 0
        %801 = vmatpush1.bf16.msra.mxu0 0
        %802 = vmatprep.subr.bf16.mxu0 0
        %803 = vmatpush1.bf16.msra.mxu0 0
        %804 = vmatprep.subr.bf16.mxu0 0
        %805 = vmatpush1.bf16.msra.mxu0 0
        %806 = vmatprep.subr.bf16.mxu0 0
        %807 = vmatpush1.bf16.msra.mxu0 0
        %808 = vmatprep.mubr.bf16.mxu0 0
        %809 = vmatmul.mubr.bf16.gmra.mrb[0].mxu0 %v753
        %v810 = vpop.f32.mrb[0].mxu0
        %v811 = vadd.f32 %v714, %v810
        %v812 = vpop.f32.mrb[0].mxu0
        %v813 = vpop.f32.mrb[0].mxu0
        %v814 = vadd.f32 %v714, %v813
        %v815 = vpop.f32.mrb[0].mxu0
        %816 = vmatprep.mubr.bf16.mxu0 0
        %817 = vmatmul.mubr.bf16.gmra.mrb[0].mxu0 %v756
        %v818 = vpop.f32.mrb[0].mxu0
        %v819 = vadd.f32 %v714, %v818
        %v820 = vpop.f32.mrb[0].mxu0
        %v821 = vpop.f32.mrb[0].mxu0
        %v822 = vadd.f32 %v714, %v821
        %v823 = vpop.f32.mrb[0].mxu0
        %824 = vmatprep.mubr.bf16.mxu0 0
        %825 = vmatmul.mubr.bf16.gmra.mrb[0].mxu0 %v759
        %v826 = vpop.f32.mrb[0].mxu0
        %v827 = vadd.f32 %v714, %v826
        %v828 = vpop.f32.mrb[0].mxu0
        %v829 = vpop.f32.mrb[0].mxu0
        %v830 = vadd.f32 %v714, %v829
        %v831 = vpop.f32.mrb[0].mxu0
        %832 = vmatprep.mubr.bf16.mxu0 0
        %833 = vmatmul.mubr.bf16.gmra.mrb[0].mxu0 %v762
        %v834 = vpop.f32.mrb[0].mxu0
        %v835 = vadd.f32 %v714, %v834
        %v836 = vpop.f32.mrb[0].mxu0
        %v837 = vpop.f32.mrb[0].mxu0
        %v838 = vadd.f32 %v714, %v837
        %v839 = vpop.f32.mrb[0].mxu0
        %840 = vmatprep.mubr.bf16.mxu0 0
        %841 = vmatmul.mubr.bf16.gmra.mrb[0].mxu0 %v765
        %v842 = vpop.f32.mrb[0].mxu0
        %v843 = vadd.f32 %v714, %v842
        %v844 = vpop.f32.mrb[0].mxu0
        %v845 = vpop.f32.mrb[0].mxu0
        %v846 = vadd.f32 %v714, %v845
        %v847 = vpop.f32.mrb[0].mxu0
        %848 = vmatprep.mubr.bf16.mxu0 0
        %849 = vmatmul.mubr.bf16.gmra.mrb[0].mxu0 %v768
        %v850 = vpop.f32.mrb[0].mxu0
        %v851 = vadd.f32 %v714, %v850
        %v852 = vpop.f32.mrb[0].mxu0
        %v853 = vpop.f32.mrb[0].mxu0
        %v854 = vadd.f32 %v714, %v853
        %v855 = vpop.f32.mrb[0].mxu0
        %856 = vmatprep.mubr.bf16.mxu0 0
        %857 = vmatmul.mubr.bf16.gmra.mrb[0].mxu0 %v771
        %v858 = vpop.f32.mrb[0].mxu0
        %v859 = vadd.f32 %v714, %v858
        %v860 = vpop.f32.mrb[0].mxu0
        %v861 = vpop.f32.mrb[0].mxu0
        %v862 = vadd.f32 %v714, %v861
        %v863 = vpop.f32.mrb[0].mxu0
        %864 = vmatprep.mubr.bf16.mxu0 0
        %865 = vmatmul.mubr.bf16.gmra.mrb[0].mxu0 %v774
        %v866 = vpop.f32.mrb[0].mxu0
        %v867 = vadd.f32 %v714, %v866
        %v868 = vpop.f32.mrb[0].mxu0
        %v869 = vpop.f32.mrb[0].mxu0
        %v870 = vadd.f32 %v714, %v869
        %v871 = vpop.f32.mrb[0].mxu0
        %872 = vdwg.mxu0
        %v873 = vpack.c.bf16 %v814, %v811
        %v874 = vpack.c.bf16 %v822, %v819
        %v875 = vpack.c.bf16 %v830, %v827
        %v876 = vpack.c.bf16 %v838, %v835
        %v877 = vpack.c.bf16 %v846, %v843
        %v878 = vpack.c.bf16 %v854, %v851
        %v879 = vpack.c.bf16 %v862, %v859
        %v880 = vpack.c.bf16 %v870, %v867
        %v881 = vld [vmem:[%s5] sm:$0xf]
        %v882 = vld [vmem:[%s5 + $0x4] sm:$0xf]
        %v883 = vld [vmem:[%s5 + $0x8] sm:$0xf]
        %v884 = vld [vmem:[%s5 + $0xc] sm:$0xf]
        %v885 = vld [vmem:[#allocation11] sm:$0x1]
        %v887 = vlaneseq
        %v888 = vshrl.u32 %v887, 7
        %v889 = vsub.s32 0, %v888
        %v890 = vrot.slane %v885, %v889
        %v896 = vunpack.c.l.b16 %v881
        %v897 = vunpack.c.l.b16 %v882
        %v898 = vunpack.c.l.b16 %v883
        %v899 = vunpack.c.l.b16 %v884
        %v900 = vpack.c.b16 %v897, %v896
        %v901 = vpack.c.b16 %v899, %v898
        %904 = vmatprep.subr.bf16.mxu0 0
        %905 = vmatpush1.bf16.msra.mxu0 %v900
        %906 = vmatprep.subr.bf16.mxu0 0
        %907 = vmatpush1.bf16.msra.mxu0 %v901
        %908 = vmatprep.subr.bf16.mxu0 0
        %909 = vmatpush1.bf16.msra.mxu0 0
        %910 = vmatprep.subr.bf16.mxu0 0
        %911 = vmatpush1.bf16.msra.mxu0 0
        %912 = vmatprep.subr.bf16.mxu0 0
        %913 = vmatpush1.bf16.msra.mxu0 0
        %914 = vmatprep.subr.bf16.mxu0 0
        %915 = vmatpush1.bf16.msra.mxu0 0
        %916 = vmatprep.subr.bf16.mxu0 0
        %917 = vmatpush1.bf16.msra.mxu0 0
        %918 = vmatprep.subr.bf16.mxu0 0
        %919 = vmatpush1.bf16.msra.mxu0 0
        %920 = vmatprep.subr.bf16.mxu0 0
        %921 = vmatpush1.bf16.msra.mxu0 0
        %922 = vmatprep.subr.bf16.mxu0 0
        %923 = vmatpush1.bf16.msra.mxu0 0
        %924 = vmatprep.subr.bf16.mxu0 0
        %925 = vmatpush1.bf16.msra.mxu0 0
        %926 = vmatprep.subr.bf16.mxu0 0
        %927 = vmatpush1.bf16.msra.mxu0 0
        %928 = vmatprep.subr.bf16.mxu0 0
        %929 = vmatpush1.bf16.msra.mxu0 0
        %930 = vmatprep.subr.bf16.mxu0 0
        %931 = vmatpush1.bf16.msra.mxu0 0
        %932 = vmatprep.subr.bf16.mxu0 0
        %933 = vmatpush1.bf16.msra.mxu0 0
        %934 = vmatprep.subr.bf16.mxu0 0
        %935 = vmatpush1.bf16.msra.mxu0 0
        %936 = vmatprep.mubr.bf16.mxu0 0
        %937 = vmatmul.mubr.bf16.gmra.mrb[0].mxu0 %v753
        %v938 = vpop.f32.mrb[0].mxu0
        %v939 = vadd.f32 %v890, %v938
        %v940 = vpop.f32.mrb[0].mxu0
        %v941 = vpop.f32.mrb[0].mxu0
        %v942 = vadd.f32 %v890, %v941
        %v943 = vpop.f32.mrb[0].mxu0
        %944 = vmatprep.mubr.bf16.mxu0 0
        %945 = vmatmul.mubr.bf16.gmra.mrb[0].mxu0 %v756
        %v946 = vpop.f32.mrb[0].mxu0
        %v947 = vadd.f32 %v890, %v946
        %v948 = vpop.f32.mrb[0].mxu0
        %v949 = vpop.f32.mrb[0].mxu0
        %v950 = vadd.f32 %v890, %v949
        %v951 = vpop.f32.mrb[0].mxu0
        %952 = vmatprep.mubr.bf16.mxu0 0
        %953 = vmatmul.mubr.bf16.gmra.mrb[0].mxu0 %v759
        %v954 = vpop.f32.mrb[0].mxu0
        %v955 = vadd.f32 %v890, %v954
        %v956 = vpop.f32.mrb[0].mxu0
        %v957 = vpop.f32.mrb[0].mxu0
        %v958 = vadd.f32 %v890, %v957
        %v959 = vpop.f32.mrb[0].mxu0
        %960 = vmatprep.mubr.bf16.mxu0 0
        %961 = vmatmul.mubr.bf16.gmra.mrb[0].mxu0 %v762
        %v962 = vpop.f32.mrb[0].mxu0
        %v963 = vadd.f32 %v890, %v962
        %v964 = vpop.f32.mrb[0].mxu0
        %v965 = vpop.f32.mrb[0].mxu0
        %v966 = vadd.f32 %v890, %v965
        %v967 = vpop.f32.mrb[0].mxu0
        %968 = vmatprep.mubr.bf16.mxu0 0
        %969 = vmatmul.mubr.bf16.gmra.mrb[0].mxu0 %v765
        %v970 = vpop.f32.mrb[0].mxu0
        %v971 = vadd.f32 %v890, %v970
        %v972 = vpop.f32.mrb[0].mxu0
        %v973 = vpop.f32.mrb[0].mxu0
        %v974 = vadd.f32 %v890, %v973
        %v975 = vpop.f32.mrb[0].mxu0
        %976 = vmatprep.mubr.bf16.mxu0 0
        %977 = vmatmul.mubr.bf16.gmra.mrb[0].mxu0 %v768
        %v978 = vpop.f32.mrb[0].mxu0
        %v979 = vadd.f32 %v890, %v978
        %v980 = vpop.f32.mrb[0].mxu0
        %v981 = vpop.f32.mrb[0].mxu0
        %v982 = vadd.f32 %v890, %v981
        %v983 = vpop.f32.mrb[0].mxu0
        %984 = vmatprep.mubr.bf16.mxu0 0
        %985 = vmatmul.mubr.bf16.gmra.mrb[0].mxu0 %v771
        %v986 = vpop.f32.mrb[0].mxu0
        %v987 = vadd.f32 %v890, %v986
        %v988 = vpop.f32.mrb[0].mxu0
        %v989 = vpop.f32.mrb[0].mxu0
        %v990 = vadd.f32 %v890, %v989
        %v991 = vpop.f32.mrb[0].mxu0
        %992 = vmatprep.mubr.bf16.mxu0 0
        %993 = vmatmul.mubr.bf16.gmra.mrb[0].mxu0 %v774
        %v994 = vpop.f32.mrb[0].mxu0
        %v995 = vadd.f32 %v890, %v994
        %v996 = vpop.f32.mrb[0].mxu0
        %v997 = vpop.f32.mrb[0].mxu0
        %v998 = vadd.f32 %v890, %v997
        %v999 = vpop.f32.mrb[0].mxu0
        %1000 = vdwg.mxu0
        %v1001 = vpack.c.bf16 %v942, %v939
        %v1002 = vpack.c.bf16 %v950, %v947
        %v1003 = vpack.c.bf16 %v958, %v955
        %v1004 = vpack.c.bf16 %v966, %v963
        %v1005 = vpack.c.bf16 %v974, %v971
        %v1006 = vpack.c.bf16 %v982, %v979
        %v1007 = vpack.c.bf16 %v990, %v987
        %v1008 = vpack.c.bf16 %v998, %v995
        %v1010 = vcombine.high %v704, %v704
        %v1012 = vunpack.c.l.s4 1966171168
        %v1013 = vunpack.c.0.s8 %v1012
        %v1014 = vlaneseq
        %v1015 = vshrl.u32 %v1014, 7
        %v1016 = vsub.s32 %v1013, %v1015
        %v1017 = vrot.slane %v704, %v1016
        %v1019 = vunpack.c.l.s4 1966171168
        %v1020 = vunpack.c.0.s8 %v1019
        %v1021 = vlaneseq
        %v1022 = vshrl.u32 %v1021, 7
        %v1023 = vsub.s32 %v1020, %v1022
        %v1024 = vrot.slane %v1010, %v1023
        %v1025 = vcombine.high %v1017, %v1017
        %v1026 = vcombine.high %v1024, %v1024
        %v1028 = vunpack.c.l.s4 1966171168
        %v1029 = vunpack.c.0.s8 %v1028
        %v1030 = vlaneseq
        %v1031 = vshrl.u32 %v1030, 7
        %v1032 = vsub.s32 %v1029, %v1031
        %v1033 = vrot.slane %v1017, %v1032
        %v1035 = vunpack.c.l.s4 1966171168
        %v1036 = vunpack.c.0.s8 %v1035
        %v1037 = vlaneseq
        %v1038 = vshrl.u32 %v1037, 7
        %v1039 = vsub.s32 %v1036, %v1038
        %v1040 = vrot.slane %v1024, %v1039
        %v1042 = vunpack.c.l.s4 1966171168
        %v1043 = vunpack.c.0.s8 %v1042
        %v1044 = vlaneseq
        %v1045 = vshrl.u32 %v1044, 7
        %v1046 = vsub.s32 %v1043, %v1045
        %v1047 = vrot.slane %v1025, %v1046
        %v1049 = vunpack.c.l.s4 1966171168
        %v1050 = vunpack.c.0.s8 %v1049
        %v1051 = vlaneseq
        %v1052 = vshrl.u32 %v1051, 7
        %v1053 = vsub.s32 %v1050, %v1052
        %v1054 = vrot.slane %v1026, %v1053
        %v1055 = vcombine.high %v1033, %v1033
        %v1056 = vcombine.high %v1040, %v1040
        %v1057 = vcombine.high %v1047, %v1047
        %v1058 = vcombine.high %v1054, %v1054
        %v1059 = vunpack.c.l.bf16 %v873
        %v1060 = vunpack.c.h.bf16 %v873
        %v1061 = vunpack.c.l.bf16 %v874
        %v1062 = vunpack.c.h.bf16 %v874
        %v1063 = vunpack.c.l.bf16 %v875
        %v1064 = vunpack.c.h.bf16 %v875
        %v1065 = vunpack.c.l.bf16 %v876
        %v1066 = vunpack.c.h.bf16 %v876
        %v1067 = vunpack.c.l.bf16 %v877
        %v1068 = vunpack.c.h.bf16 %v877
        %v1069 = vunpack.c.l.bf16 %v878
        %v1070 = vunpack.c.h.bf16 %v878
        %v1071 = vunpack.c.l.bf16 %v879
        %v1072 = vunpack.c.h.bf16 %v879
        %v1073 = vunpack.c.l.bf16 %v880
        %v1074 = vunpack.c.h.bf16 %v880
        %v1075 = vlaneseq
        %v1076 = vshrl.u32 %v1075, 7
        %v1077 = vsub.s32 0, %v1076
        %v1078 = vrot.slane %v1033, %v1077
        %v1079 = vlaneseq
        %v1080 = vshrl.u32 %v1079, 7
        %v1081 = vsub.s32 0, %v1080
        %v1082 = vrot.slane %v1047, %v1081
        %v1083 = vlaneseq
        %v1084 = vshrl.u32 %v1083, 7
        %v1085 = vsub.s32 0, %v1084
        %v1086 = vrot.slane %v1055, %v1085
        %v1087 = vlaneseq
        %v1088 = vshrl.u32 %v1087, 7
        %v1089 = vsub.s32 0, %v1088
        %v1090 = vrot.slane %v1057, %v1089
        %v1091 = vlaneseq
        %v1092 = vshrl.u32 %v1091, 7
        %v1093 = vsub.s32 0, %v1092
        %v1094 = vrot.slane %v1040, %v1093
        %v1095 = vlaneseq
        %v1096 = vshrl.u32 %v1095, 7
        %v1097 = vsub.s32 0, %v1096
        %v1098 = vrot.slane %v1054, %v1097
        %v1099 = vlaneseq
        %v1100 = vshrl.u32 %v1099, 7
        %v1101 = vsub.s32 0, %v1100
        %v1102 = vrot.slane %v1056, %v1101
        %v1103 = vlaneseq
        %v1104 = vshrl.u32 %v1103, 7
        %v1105 = vsub.s32 0, %v1104
        %v1106 = vrot.slane %v1058, %v1105
        %v1115 = vmul.f32 %v1078, %v1059
        %v1116 = vmul.f32 %v1078, %v1060
        %v1117 = vmul.f32 %v1082, %v1061
        %v1118 = vmul.f32 %v1082, %v1062
        %v1119 = vmul.f32 %v1086, %v1063
        %v1120 = vmul.f32 %v1086, %v1064
        %v1121 = vmul.f32 %v1090, %v1065
        %v1122 = vmul.f32 %v1090, %v1066
        %v1123 = vmul.f32 %v1094, %v1067
        %v1124 = vmul.f32 %v1094, %v1068
        %v1125 = vmul.f32 %v1098, %v1069
        %v1126 = vmul.f32 %v1098, %v1070
        %v1127 = vmul.f32 %v1102, %v1071
        %v1128 = vmul.f32 %v1102, %v1072
        %v1129 = vmul.f32 %v1106, %v1073
        %v1130 = vmul.f32 %v1106, %v1074
        %v1131 = vpack.c.bf16 %v1116, %v1115
        %v1132 = vpack.c.bf16 %v1118, %v1117
        %v1133 = vpack.c.bf16 %v1120, %v1119
        %v1134 = vpack.c.bf16 %v1122, %v1121
        %v1135 = vpack.c.bf16 %v1124, %v1123
        %v1136 = vpack.c.bf16 %v1126, %v1125
        %v1137 = vpack.c.bf16 %v1128, %v1127
        %v1138 = vpack.c.bf16 %v1130, %v1129
        %v1139 = vld [vmem:[%s7] sm:$0x3]
        %v1141 = vsel %vm660, %v1131, 0
        %v1144 = vsel %vm660, %v1132, 0
        %v1147 = vsel %vm660, %v1133, 0
        %v1150 = vsel %vm660, %v1134, 0
        %v1153 = vsel %vm660, %v1135, 0
        %v1156 = vsel %vm660, %v1136, 0
        %v1159 = vsel %vm660, %v1137, 0
        %v1162 = vsel %vm660, %v1138, 0
        %v1165 = vsel %vm660, %v1139, 0
        %1167 = vmatprep.subr.bf16.mxu0 0
        %1168 = vmatpush1.bf16.xpose.msra.mxu0 %v1165
        %1169 = vmatprep.subr.bf16.mxu0 0
        %1170 = vmatpush1.bf16.xpose.msra.mxu0 0
        %1171 = vmatprep.subr.bf16.mxu0 0
        %1172 = vmatpush1.bf16.xpose.msra.mxu0 0
        %1173 = vmatprep.subr.bf16.mxu0 0
        %1174 = vmatpush1.bf16.xpose.msra.mxu0 0
        %1175 = vmatprep.subr.bf16.mxu0 0
        %1176 = vmatpush1.bf16.xpose.msra.mxu0 0
        %1177 = vmatprep.subr.bf16.mxu0 0
        %1178 = vmatpush1.bf16.xpose.msra.mxu0 0
        %1179 = vmatprep.subr.bf16.mxu0 0
        %1180 = vmatpush1.bf16.xpose.msra.mxu0 0
        %1181 = vmatprep.subr.bf16.mxu0 0
        %1182 = vmatpush1.bf16.xpose.msra.mxu0 0
        %1183 = vmatprep.subr.bf16.mxu0 0
        %1184 = vmatpush1.bf16.xpose.msra.mxu0 0
        %1185 = vmatprep.subr.bf16.mxu0 0
        %1186 = vmatpush1.bf16.xpose.msra.mxu0 0
        %1187 = vmatprep.subr.bf16.mxu0 0
        %1188 = vmatpush1.bf16.xpose.msra.mxu0 0
        %1189 = vmatprep.subr.bf16.mxu0 0
        %1190 = vmatpush1.bf16.xpose.msra.mxu0 0
        %1191 = vmatprep.subr.bf16.mxu0 0
        %1192 = vmatpush1.bf16.xpose.msra.mxu0 0
        %1193 = vmatprep.subr.bf16.mxu0 0
        %1194 = vmatpush1.bf16.xpose.msra.mxu0 0
        %1195 = vmatprep.subr.bf16.mxu0 0
        %1196 = vmatpush1.bf16.xpose.msra.mxu0 0
        %1197 = vmatprep.subr.bf16.mxu0 0
        %1198 = vmatpush1.bf16.xpose.msra.mxu0 0
        %1199 = vmatprep.mubr.bf16.mxu0 0
        %1200 = vmatmul.mubr.bf16.gmra.mrb[0].mxu0 %v1141
        %v1201 = vpop.f32.mrb[0].mxu0
        %v1202 = vadd.f32 0.0, %v1201
        %v1203 = vpop.f32.mrb[0].mxu0
        %v1204 = vpop.f32.mrb[0].mxu0
        %v1205 = vadd.f32 0.0, %v1204
        %v1206 = vpop.f32.mrb[0].mxu0
        %1207 = vmatprep.mubr.bf16.mxu0 0
        %1208 = vmatmul.mubr.bf16.gmra.mrb[0].mxu0 %v1144
        %v1209 = vpop.f32.mrb[0].mxu0
        %v1210 = vadd.f32 0.0, %v1209
        %v1211 = vpop.f32.mrb[0].mxu0
        %v1212 = vpop.f32.mrb[0].mxu0
        %v1213 = vadd.f32 0.0, %v1212
        %v1214 = vpop.f32.mrb[0].mxu0
        %1215 = vmatprep.mubr.bf16.mxu0 0
        %1216 = vmatmul.mubr.bf16.gmra.mrb[0].mxu0 %v1147
        %v1217 = vpop.f32.mrb[0].mxu0
        %v1218 = vadd.f32 0.0, %v1217
        %v1219 = vpop.f32.mrb[0].mxu0
        %v1220 = vpop.f32.mrb[0].mxu0
        %v1221 = vadd.f32 0.0, %v1220
        %v1222 = vpop.f32.mrb[0].mxu0
        %1223 = vmatprep.mubr.bf16.mxu0 0
        %1224 = vmatmul.mubr.bf16.gmra.mrb[0].mxu0 %v1150
        %v1225 = vpop.f32.mrb[0].mxu0
        %v1226 = vadd.f32 0.0, %v1225
        %v1227 = vpop.f32.mrb[0].mxu0
        %v1228 = vpop.f32.mrb[0].mxu0
        %v1229 = vadd.f32 0.0, %v1228
        %v1230 = vpop.f32.mrb[0].mxu0
        %1231 = vmatprep.mubr.bf16.mxu0 0
        %1232 = vmatmul.mubr.bf16.gmra.mrb[0].mxu0 %v1153
        %v1233 = vpop.f32.mrb[0].mxu0
        %v1234 = vadd.f32 0.0, %v1233
        %v1235 = vpop.f32.mrb[0].mxu0
        %v1236 = vpop.f32.mrb[0].mxu0
        %v1237 = vadd.f32 0.0, %v1236
        %v1238 = vpop.f32.mrb[0].mxu0
        %1239 = vmatprep.mubr.bf16.mxu0 0
        %1240 = vmatmul.mubr.bf16.gmra.mrb[0].mxu0 %v1156
        %v1241 = vpop.f32.mrb[0].mxu0
        %v1242 = vadd.f32 0.0, %v1241
        %v1243 = vpop.f32.mrb[0].mxu0
        %v1244 = vpop.f32.mrb[0].mxu0
        %v1245 = vadd.f32 0.0, %v1244
        %v1246 = vpop.f32.mrb[0].mxu0
        %1247 = vmatprep.mubr.bf16.mxu0 0
        %1248 = vmatmul.mubr.bf16.gmra.mrb[0].mxu0 %v1159
        %v1249 = vpop.f32.mrb[0].mxu0
        %v1250 = vadd.f32 0.0, %v1249
        %v1251 = vpop.f32.mrb[0].mxu0
        %v1252 = vpop.f32.mrb[0].mxu0
        %v1253 = vadd.f32 0.0, %v1252
        %v1254 = vpop.f32.mrb[0].mxu0
        %1255 = vmatprep.mubr.bf16.mxu0 0
        %1256 = vmatmul.mubr.bf16.gmra.mrb[0].mxu0 %v1162
        %v1257 = vpop.f32.mrb[0].mxu0
        %v1258 = vadd.f32 0.0, %v1257
        %v1259 = vpop.f32.mrb[0].mxu0
        %v1260 = vpop.f32.mrb[0].mxu0
        %v1261 = vadd.f32 0.0, %v1260
        %v1262 = vpop.f32.mrb[0].mxu0
        %1263 = vdwg.mxu0
        %vm1264 = vcmask 31744
        %v1265 = vsel %vm1264, %v1202, -inf
        %v1266 = vsel %vm1264, %v1205, -inf
        %v1267 = vmax.f32 %v1265, %v1266
        %v1268 = vrot.slane %v1267, 4
        %v1269 = vmax.f32 %v1267, %v1268
        %v1270 = vrot.slane %v1269, 2
        %v1271 = vmax.f32 %v1269, %v1270
        %v1272 = vrot.slane %v1271, 1
        %v1273 = vmax.f32 %v1271, %v1272
        %v1274 = vsel %vm1264, %v1210, -inf
        %v1275 = vsel %vm1264, %v1213, -inf
        %v1276 = vmax.f32 %v1274, %v1275
        %v1277 = vrot.slane %v1276, 4
        %v1278 = vmax.f32 %v1276, %v1277
        %v1279 = vrot.slane %v1278, 2
        %v1280 = vmax.f32 %v1278, %v1279
        %v1281 = vrot.slane %v1280, 1
        %v1282 = vmax.f32 %v1280, %v1281
        %v1283 = vsel %vm1264, %v1218, -inf
        %v1284 = vsel %vm1264, %v1221, -inf
        %v1285 = vmax.f32 %v1283, %v1284
        %v1286 = vrot.slane %v1285, 4
        %v1287 = vmax.f32 %v1285, %v1286
        %v1288 = vrot.slane %v1287, 2
        %v1289 = vmax.f32 %v1287, %v1288
        %v1290 = vrot.slane %v1289, 1
        %v1291 = vmax.f32 %v1289, %v1290
        %v1292 = vsel %vm1264, %v1226, -inf
        %v1293 = vsel %vm1264, %v1229, -inf
        %v1294 = vmax.f32 %v1292, %v1293
        %v1295 = vrot.slane %v1294, 4
        %v1296 = vmax.f32 %v1294, %v1295
        %v1297 = vrot.slane %v1296, 2
        %v1298 = vmax.f32 %v1296, %v1297
        %v1299 = vrot.slane %v1298, 1
        %v1300 = vmax.f32 %v1298, %v1299
        %v1301 = vsel %vm1264, %v1234, -inf
        %v1302 = vsel %vm1264, %v1237, -inf
        %v1303 = vmax.f32 %v1301, %v1302
        %v1304 = vrot.slane %v1303, 4
        %v1305 = vmax.f32 %v1303, %v1304
        %v1306 = vrot.slane %v1305, 2
        %v1307 = vmax.f32 %v1305, %v1306
        %v1308 = vrot.slane %v1307, 1
        %v1309 = vmax.f32 %v1307, %v1308
        %v1310 = vsel %vm1264, %v1242, -inf
        %v1311 = vsel %vm1264, %v1245, -inf
        %v1312 = vmax.f32 %v1310, %v1311
        %v1313 = vrot.slane %v1312, 4
        %v1314 = vmax.f32 %v1312, %v1313
        %v1315 = vrot.slane %v1314, 2
        %v1316 = vmax.f32 %v1314, %v1315
        %v1317 = vrot.slane %v1316, 1
        %v1318 = vmax.f32 %v1316, %v1317
        %v1319 = vsel %vm1264, %v1250, -inf
        %v1320 = vsel %vm1264, %v1253, -inf
        %v1321 = vmax.f32 %v1319, %v1320
        %v1322 = vrot.slane %v1321, 4
        %v1323 = vmax.f32 %v1321, %v1322
        %v1324 = vrot.slane %v1323, 2
        %v1325 = vmax.f32 %v1323, %v1324
        %v1326 = vrot.slane %v1325, 1
        %v1327 = vmax.f32 %v1325, %v1326
        %v1328 = vsel %vm1264, %v1258, -inf
        %v1329 = vsel %vm1264, %v1261, -inf
        %v1330 = vmax.f32 %v1328, %v1329
        %v1331 = vrot.slane %v1330, 4
        %v1332 = vmax.f32 %v1330, %v1331
        %v1333 = vrot.slane %v1332, 2
        %v1334 = vmax.f32 %v1332, %v1333
        %v1335 = vrot.slane %v1334, 1
        %v1336 = vmax.f32 %v1334, %v1335
        %v1337 = vsub.f32 %v1202, %v1273
        %v1338 = vsub.f32 %v1205, %v1273
        %v1339 = vsub.f32 %v1210, %v1282
        %v1340 = vsub.f32 %v1213, %v1282
        %v1341 = vsub.f32 %v1218, %v1291
        %v1342 = vsub.f32 %v1221, %v1291
        %v1343 = vsub.f32 %v1226, %v1300
        %v1344 = vsub.f32 %v1229, %v1300
        %v1345 = vsub.f32 %v1234, %v1309
        %v1346 = vsub.f32 %v1237, %v1309
        %v1347 = vsub.f32 %v1242, %v1318
        %v1348 = vsub.f32 %v1245, %v1318
        %v1349 = vsub.f32 %v1250, %v1327
        %v1350 = vsub.f32 %v1253, %v1327
        %v1351 = vsub.f32 %v1258, %v1336
        %v1352 = vsub.f32 %v1261, %v1336
        %v1353 = vmul.f32 %v1337, 1.442695
        %v1354 = vpow.pop %v1353
        %v1355 = vmul.f32 %v1338, 1.442695
        %v1356 = vpow.pop %v1355
        %v1357 = vmul.f32 %v1339, 1.442695
        %v1358 = vpow.pop %v1357
        %v1359 = vmul.f32 %v1340, 1.442695
        %v1360 = vpow.pop %v1359
        %v1361 = vmul.f32 %v1341, 1.442695
        %v1362 = vpow.pop %v1361
        %v1363 = vmul.f32 %v1342, 1.442695
        %v1364 = vpow.pop %v1363
        %v1365 = vmul.f32 %v1343, 1.442695
        %v1366 = vpow.pop %v1365
        %v1367 = vmul.f32 %v1344, 1.442695
        %v1368 = vpow.pop %v1367
        %v1369 = vmul.f32 %v1345, 1.442695
        %v1370 = vpow.pop %v1369
        %v1371 = vmul.f32 %v1346, 1.442695
        %v1372 = vpow.pop %v1371
        %v1373 = vmul.f32 %v1347, 1.442695
        %v1374 = vpow.pop %v1373
        %v1375 = vmul.f32 %v1348, 1.442695
        %v1376 = vpow.pop %v1375
        %v1377 = vmul.f32 %v1349, 1.442695
        %v1378 = vpow.pop %v1377
        %v1379 = vmul.f32 %v1350, 1.442695
        %v1380 = vpow.pop %v1379
        %v1381 = vmul.f32 %v1351, 1.442695
        %v1382 = vpow.pop %v1381
        %v1383 = vmul.f32 %v1352, 1.442695
        %v1384 = vpow.pop %v1383
        %v1385 = vsel %vm1264, %v1354, 0.0
        %v1386 = vsel %vm1264, %v1356, 0.0
        %v1387 = vadd.f32 %v1385, %v1386
        %v1388 = vrot.slane %v1387, 4
        %v1389 = vadd.f32 %v1387, %v1388
        %v1390 = vrot.slane %v1389, 2
        %v1391 = vadd.f32 %v1389, %v1390
        %v1392 = vrot.slane %v1391, 1
        %v1393 = vadd.f32 %v1391, %v1392
        %v1394 = vsel %vm1264, %v1358, 0.0
        %v1395 = vsel %vm1264, %v1360, 0.0
        %v1396 = vadd.f32 %v1394, %v1395
        %v1397 = vrot.slane %v1396, 4
        %v1398 = vadd.f32 %v1396, %v1397
        %v1399 = vrot.slane %v1398, 2
        %v1400 = vadd.f32 %v1398, %v1399
        %v1401 = vrot.slane %v1400, 1
        %v1402 = vadd.f32 %v1400, %v1401
        %v1403 = vsel %vm1264, %v1362, 0.0
        %v1404 = vsel %vm1264, %v1364, 0.0
        %v1405 = vadd.f32 %v1403, %v1404
        %v1406 = vrot.slane %v1405, 4
        %v1407 = vadd.f32 %v1405, %v1406
        %v1408 = vrot.slane %v1407, 2
        %v1409 = vadd.f32 %v1407, %v1408
        %v1410 = vrot.slane %v1409, 1
        %v1411 = vadd.f32 %v1409, %v1410
        %v1412 = vsel %vm1264, %v1366, 0.0
        %v1413 = vsel %vm1264, %v1368, 0.0
        %v1414 = vadd.f32 %v1412, %v1413
        %v1415 = vrot.slane %v1414, 4
        %v1416 = vadd.f32 %v1414, %v1415
        %v1417 = vrot.slane %v1416, 2
        %v1418 = vadd.f32 %v1416, %v1417
        %v1419 = vrot.slane %v1418, 1
        %v1420 = vadd.f32 %v1418, %v1419
        %v1421 = vsel %vm1264, %v1370, 0.0
        %v1422 = vsel %vm1264, %v1372, 0.0
        %v1423 = vadd.f32 %v1421, %v1422
        %v1424 = vrot.slane %v1423, 4
        %v1425 = vadd.f32 %v1423, %v1424
        %v1426 = vrot.slane %v1425, 2
        %v1427 = vadd.f32 %v1425, %v1426
        %v1428 = vrot.slane %v1427, 1
        %v1429 = vadd.f32 %v1427, %v1428
        %v1430 = vsel %vm1264, %v1374, 0.0
        %v1431 = vsel %vm1264, %v1376, 0.0
        %v1432 = vadd.f32 %v1430, %v1431
        %v1433 = vrot.slane %v1432, 4
        %v1434 = vadd.f32 %v1432, %v1433
        %v1435 = vrot.slane %v1434, 2
        %v1436 = vadd.f32 %v1434, %v1435
        %v1437 = vrot.slane %v1436, 1
        %v1438 = vadd.f32 %v1436, %v1437
        %v1439 = vsel %vm1264, %v1378, 0.0
        %v1440 = vsel %vm1264, %v1380, 0.0
        %v1441 = vadd.f32 %v1439, %v1440
        %v1442 = vrot.slane %v1441, 4
        %v1443 = vadd.f32 %v1441, %v1442
        %v1444 = vrot.slane %v1443, 2
        %v1445 = vadd.f32 %v1443, %v1444
        %v1446 = vrot.slane %v1445, 1
        %v1447 = vadd.f32 %v1445, %v1446
        %v1448 = vsel %vm1264, %v1382, 0.0
        %v1449 = vsel %vm1264, %v1384, 0.0
        %v1450 = vadd.f32 %v1448, %v1449
        %v1451 = vrot.slane %v1450, 4
        %v1452 = vadd.f32 %v1450, %v1451
        %v1453 = vrot.slane %v1452, 2
        %v1454 = vadd.f32 %v1452, %v1453
        %v1455 = vrot.slane %v1454, 1
        %v1456 = vadd.f32 %v1454, %v1455
        %v1457 = vrcp.pop %v1393
        %v1458 = vrcp.pop %v1402
        %v1459 = vrcp.pop %v1411
        %v1460 = vrcp.pop %v1420
        %v1461 = vrcp.pop %v1429
        %v1462 = vrcp.pop %v1438
        %v1463 = vrcp.pop %v1447
        %v1464 = vrcp.pop %v1456
        %v1465 = vmul.f32 %v1354, %v1457
        %v1466 = vmul.f32 %v1356, %v1457
        %v1467 = vmul.f32 %v1358, %v1458
        %v1468 = vmul.f32 %v1360, %v1458
        %v1469 = vmul.f32 %v1362, %v1459
        %v1470 = vmul.f32 %v1364, %v1459
        %v1471 = vmul.f32 %v1366, %v1460
        %v1472 = vmul.f32 %v1368, %v1460
        %v1473 = vmul.f32 %v1370, %v1461
        %v1474 = vmul.f32 %v1372, %v1461
        %v1475 = vmul.f32 %v1374, %v1462
        %v1476 = vmul.f32 %v1376, %v1462
        %v1477 = vmul.f32 %v1378, %v1463
        %v1478 = vmul.f32 %v1380, %v1463
        %v1479 = vmul.f32 %v1382, %v1464
        %v1480 = vmul.f32 %v1384, %v1464
        %v1481 = vpack.c.bf16 %v1466, %v1465
        %v1482 = vpack.c.bf16 %v1468, %v1467
        %v1483 = vpack.c.bf16 %v1470, %v1469
        %v1484 = vpack.c.bf16 %v1472, %v1471
        %v1485 = vpack.c.bf16 %v1474, %v1473
        %v1486 = vpack.c.bf16 %v1476, %v1475
        %v1487 = vpack.c.bf16 %v1478, %v1477
        %v1488 = vpack.c.bf16 %v1480, %v1479
        %v1490 = vsel %vm1264, %v1481, 0
        %v1493 = vsel %vm1264, %v1482, 0
        %v1496 = vsel %vm1264, %v1483, 0
        %v1499 = vsel %vm1264, %v1484, 0
        %v1502 = vsel %vm1264, %v1485, 0
        %v1505 = vsel %vm1264, %v1486, 0
        %v1508 = vsel %vm1264, %v1487, 0
        %v1511 = vsel %vm1264, %v1488, 0
        %vm1513 = vcmask 1041408
        %v1514 = vsel %vm1513, %v1139, 0
        %1516 = vmatprep.subr.bf16.mxu0 0
        %1517 = vmatpush1.bf16.msra.mxu0 %v1514
        %1518 = vmatprep.subr.bf16.mxu0 0
        %1519 = vmatpush1.bf16.msra.mxu0 0
        %1520 = vmatprep.subr.bf16.mxu0 0
        %1521 = vmatpush1.bf16.msra.mxu0 0
        %1522 = vmatprep.subr.bf16.mxu0 0
        %1523 = vmatpush1.bf16.msra.mxu0 0
        %1524 = vmatprep.subr.bf16.mxu0 0
        %1525 = vmatpush1.bf16.msra.mxu0 0
        %1526 = vmatprep.subr.bf16.mxu0 0
        %1527 = vmatpush1.bf16.msra.mxu0 0
        %1528 = vmatprep.subr.bf16.mxu0 0
        %1529 = vmatpush1.bf16.msra.mxu0 0
        %1530 = vmatprep.subr.bf16.mxu0 0
        %1531 = vmatpush1.bf16.msra.mxu0 0
        %1532 = vmatprep.subr.bf16.mxu0 0
        %1533 = vmatpush1.bf16.msra.mxu0 0
        %1534 = vmatprep.subr.bf16.mxu0 0
        %1535 = vmatpush1.bf16.msra.mxu0 0
        %1536 = vmatprep.subr.bf16.mxu0 0
        %1537 = vmatpush1.bf16.msra.mxu0 0
        %1538 = vmatprep.subr.bf16.mxu0 0
        %1539 = vmatpush1.bf16.msra.mxu0 0
        %1540 = vmatprep.subr.bf16.mxu0 0
        %1541 = vmatpush1.bf16.msra.mxu0 0
        %1542 = vmatprep.subr.bf16.mxu0 0
        %1543 = vmatpush1.bf16.msra.mxu0 0
        %1544 = vmatprep.subr.bf16.mxu0 0
        %1545 = vmatpush1.bf16.msra.mxu0 0
        %1546 = vmatprep.subr.bf16.mxu0 0
        %1547 = vmatpush1.bf16.msra.mxu0 0
        %1548 = vmatprep.mubr.bf16.mxu0 0
        %1549 = vmatmul.mubr.bf16.gmra.mrb[0].mxu0 %v1490
        %v1550 = vpop.f32.mrb[0].mxu0
        %v1551 = vadd.f32 0.0, %v1550
        %v1552 = vpop.f32.mrb[0].mxu0
        %v1553 = vpop.f32.mrb[0].mxu0
        %v1554 = vadd.f32 0.0, %v1553
        %v1555 = vpop.f32.mrb[0].mxu0
        %1556 = vmatprep.mubr.bf16.mxu0 0
        %1557 = vmatmul.mubr.bf16.gmra.mrb[0].mxu0 %v1493
        %v1558 = vpop.f32.mrb[0].mxu0
        %v1559 = vadd.f32 0.0, %v1558
        %v1560 = vpop.f32.mrb[0].mxu0
        %v1561 = vpop.f32.mrb[0].mxu0
        %v1562 = vadd.f32 0.0, %v1561
        %v1563 = vpop.f32.mrb[0].mxu0
        %1564 = vmatprep.mubr.bf16.mxu0 0
        %1565 = vmatmul.mubr.bf16.gmra.mrb[0].mxu0 %v1496
        %v1566 = vpop.f32.mrb[0].mxu0
        %v1567 = vadd.f32 0.0, %v1566
        %v1568 = vpop.f32.mrb[0].mxu0
        %v1569 = vpop.f32.mrb[0].mxu0
        %v1570 = vadd.f32 0.0, %v1569
        %v1571 = vpop.f32.mrb[0].mxu0
        %1572 = vmatprep.mubr.bf16.mxu0 0
        %1573 = vmatmul.mubr.bf16.gmra.mrb[0].mxu0 %v1499
        %v1574 = vpop.f32.mrb[0].mxu0
        %v1575 = vadd.f32 0.0, %v1574
        %v1576 = vpop.f32.mrb[0].mxu0
        %v1577 = vpop.f32.mrb[0].mxu0
        %v1578 = vadd.f32 0.0, %v1577
        %v1579 = vpop.f32.mrb[0].mxu0
        %1580 = vmatprep.mubr.bf16.mxu0 0
        %1581 = vmatmul.mubr.bf16.gmra.mrb[0].mxu0 %v1502
        %v1582 = vpop.f32.mrb[0].mxu0
        %v1583 = vadd.f32 0.0, %v1582
        %v1584 = vpop.f32.mrb[0].mxu0
        %v1585 = vpop.f32.mrb[0].mxu0
        %v1586 = vadd.f32 0.0, %v1585
        %v1587 = vpop.f32.mrb[0].mxu0
        %1588 = vmatprep.mubr.bf16.mxu0 0
        %1589 = vmatmul.mubr.bf16.gmra.mrb[0].mxu0 %v1505
        %v1590 = vpop.f32.mrb[0].mxu0
        %v1591 = vadd.f32 0.0, %v1590
        %v1592 = vpop.f32.mrb[0].mxu0
        %v1593 = vpop.f32.mrb[0].mxu0
        %v1594 = vadd.f32 0.0, %v1593
        %v1595 = vpop.f32.mrb[0].mxu0
        %1596 = vmatprep.mubr.bf16.mxu0 0
        %1597 = vmatmul.mubr.bf16.gmra.mrb[0].mxu0 %v1508
        %v1598 = vpop.f32.mrb[0].mxu0
        %v1599 = vadd.f32 0.0, %v1598
        %v1600 = vpop.f32.mrb[0].mxu0
        %v1601 = vpop.f32.mrb[0].mxu0
        %v1602 = vadd.f32 0.0, %v1601
        %v1603 = vpop.f32.mrb[0].mxu0
        %1604 = vmatprep.mubr.bf16.mxu0 0
        %1605 = vmatmul.mubr.bf16.gmra.mrb[0].mxu0 %v1511
        %v1606 = vpop.f32.mrb[0].mxu0
        %v1607 = vadd.f32 0.0, %v1606
        %v1608 = vpop.f32.mrb[0].mxu0
        %v1609 = vpop.f32.mrb[0].mxu0
        %v1610 = vadd.f32 0.0, %v1609
        %v1611 = vpop.f32.mrb[0].mxu0
        %1612 = vdwg.mxu0
        %v1613 = vunpack.c.l.bf16 %v1001
        %v1614 = vunpack.c.h.bf16 %v1001
        %v1615 = vunpack.c.l.bf16 %v1002
        %v1616 = vunpack.c.h.bf16 %v1002
        %v1617 = vunpack.c.l.bf16 %v1003
        %v1618 = vunpack.c.h.bf16 %v1003
        %v1619 = vunpack.c.l.bf16 %v1004
        %v1620 = vunpack.c.h.bf16 %v1004
        %v1621 = vunpack.c.l.bf16 %v1005
        %v1622 = vunpack.c.h.bf16 %v1005
        %v1623 = vunpack.c.l.bf16 %v1006
        %v1624 = vunpack.c.h.bf16 %v1006
        %v1625 = vunpack.c.l.bf16 %v1007
        %v1626 = vunpack.c.h.bf16 %v1007
        %v1627 = vunpack.c.l.bf16 %v1008
        %v1628 = vunpack.c.h.bf16 %v1008
        %v1629 = vmul.f32 %v1551, %v1613
        %v1630 = vmul.f32 %v1554, %v1614
        %v1631 = vmul.f32 %v1559, %v1615
        %v1632 = vmul.f32 %v1562, %v1616
        %v1633 = vmul.f32 %v1567, %v1617
        %v1634 = vmul.f32 %v1570, %v1618
        %v1635 = vmul.f32 %v1575, %v1619
        %v1636 = vmul.f32 %v1578, %v1620
        %v1637 = vmul.f32 %v1583, %v1621
        %v1638 = vmul.f32 %v1586, %v1622
        %v1639 = vmul.f32 %v1591, %v1623
        %v1640 = vmul.f32 %v1594, %v1624
        %v1641 = vmul.f32 %v1599, %v1625
        %v1642 = vmul.f32 %v1602, %v1626
        %v1643 = vmul.f32 %v1607, %v1627
        %v1644 = vmul.f32 %v1610, %v1628
        %v1645 = vsel %vm660, %v1629, 0.0
        %v1646 = vsel %vm660, %v1630, 0.0
        %v1647 = vadd.f32 %v1645, %v1646
        %v1648 = vrot.slane %v1647, 4
        %v1649 = vadd.f32 %v1647, %v1648
        %v1650 = vrot.slane %v1649, 2
        %v1651 = vadd.f32 %v1649, %v1650
        %v1652 = vrot.slane %v1651, 1
        %v1653 = vadd.f32 %v1651, %v1652
        %v1654 = vsel %vm660, %v1631, 0.0
        %v1655 = vsel %vm660, %v1632, 0.0
        %v1656 = vadd.f32 %v1654, %v1655
        %v1657 = vrot.slane %v1656, 4
        %v1658 = vadd.f32 %v1656, %v1657
        %v1659 = vrot.slane %v1658, 2
        %v1660 = vadd.f32 %v1658, %v1659
        %v1661 = vrot.slane %v1660, 1
        %v1662 = vadd.f32 %v1660, %v1661
        %v1663 = vsel %vm660, %v1633, 0.0
        %v1664 = vsel %vm660, %v1634, 0.0
        %v1665 = vadd.f32 %v1663, %v1664
        %v1666 = vrot.slane %v1665, 4
        %v1667 = vadd.f32 %v1665, %v1666
        %v1668 = vrot.slane %v1667, 2
        %v1669 = vadd.f32 %v1667, %v1668
        %v1670 = vrot.slane %v1669, 1
        %v1671 = vadd.f32 %v1669, %v1670
        %v1672 = vsel %vm660, %v1635, 0.0
        %v1673 = vsel %vm660, %v1636, 0.0
        %v1674 = vadd.f32 %v1672, %v1673
        %v1675 = vrot.slane %v1674, 4
        %v1676 = vadd.f32 %v1674, %v1675
        %v1677 = vrot.slane %v1676, 2
        %v1678 = vadd.f32 %v1676, %v1677
        %v1679 = vrot.slane %v1678, 1
        %v1680 = vadd.f32 %v1678, %v1679
        %v1681 = vsel %vm660, %v1637, 0.0
        %v1682 = vsel %vm660, %v1638, 0.0
        %v1683 = vadd.f32 %v1681, %v1682
        %v1684 = vrot.slane %v1683, 4
        %v1685 = vadd.f32 %v1683, %v1684
        %v1686 = vrot.slane %v1685, 2
        %v1687 = vadd.f32 %v1685, %v1686
        %v1688 = vrot.slane %v1687, 1
        %v1689 = vadd.f32 %v1687, %v1688
        %v1690 = vsel %vm660, %v1639, 0.0
        %v1691 = vsel %vm660, %v1640, 0.0
        %v1692 = vadd.f32 %v1690, %v1691
        %v1693 = vrot.slane %v1692, 4
        %v1694 = vadd.f32 %v1692, %v1693
        %v1695 = vrot.slane %v1694, 2
        %v1696 = vadd.f32 %v1694, %v1695
        %v1697 = vrot.slane %v1696, 1
        %v1698 = vadd.f32 %v1696, %v1697
        %v1699 = vsel %vm660, %v1641, 0.0
        %v1700 = vsel %vm660, %v1642, 0.0
        %v1701 = vadd.f32 %v1699, %v1700
        %v1702 = vrot.slane %v1701, 4
        %v1703 = vadd.f32 %v1701, %v1702
        %v1704 = vrot.slane %v1703, 2
        %v1705 = vadd.f32 %v1703, %v1704
        %v1706 = vrot.slane %v1705, 1
        %v1707 = vadd.f32 %v1705, %v1706
        %v1708 = vsel %vm660, %v1643, 0.0
        %v1709 = vsel %vm660, %v1644, 0.0
        %v1710 = vadd.f32 %v1708, %v1709
        %v1711 = vrot.slane %v1710, 4
        %v1712 = vadd.f32 %v1710, %v1711
        %v1713 = vrot.slane %v1712, 2
        %v1714 = vadd.f32 %v1712, %v1713
        %v1715 = vrot.slane %v1714, 1
        %v1716 = vadd.f32 %v1714, %v1715
        %v1717 = vpack.c.bf16 %v1653, %v1653
        %v1718 = vpack.c.bf16 %v1662, %v1662
        %v1719 = vpack.c.bf16 %v1671, %v1671
        %v1720 = vpack.c.bf16 %v1680, %v1680
        %v1721 = vpack.c.bf16 %v1689, %v1689
        %v1722 = vpack.c.bf16 %v1698, %v1698
        %v1723 = vpack.c.bf16 %v1707, %v1707
        %v1724 = vpack.c.bf16 %v1716, %v1716
        %v1725 = vld [vmem:[#allocation13] sm:$0xf]
        %v1726 = vld [vmem:[#allocation13 + $0x4] sm:$0xf]
        %v1727 = vld [vmem:[#allocation13 + $0x8] sm:$0xf]
        %v1728 = vld [vmem:[#allocation13 + $0xc] sm:$0xf]
        %v1729 = vld [vmem:[#allocation14] sm:$0x1]
        %v1731 = vlaneseq
        %v1732 = vshrl.u32 %v1731, 7
        %v1733 = vsub.s32 0, %v1732
        %v1734 = vrot.slane %v1729, %v1733
        %v1744 = vunpack.c.l.b16 %v1717
        %v1745 = vunpack.c.l.b16 %v1718
        %v1746 = vunpack.c.l.b16 %v1719
        %v1747 = vunpack.c.l.b16 %v1720
        %v1748 = vunpack.c.l.b16 %v1721
        %v1749 = vunpack.c.l.b16 %v1722
        %v1750 = vunpack.c.l.b16 %v1723
        %v1751 = vunpack.c.l.b16 %v1724
        %v1752 = vsel %vm627, %v1745, %v1744
        %v1753 = vsel %vm630, %v1746, %v1752
        %v1754 = vsel %vm633, %v1747, %v1753
        %v1755 = vsel %vm636, %v1748, %v1754
        %v1756 = vsel %vm639, %v1749, %v1755
        %v1757 = vsel %vm642, %v1750, %v1756
        %v1758 = vsel %vm645, %v1751, %v1757
        %v1759 = vpack.c.b16 %v1758, %v1758
        %v1764 = vunpack.c.l.b16 %v1725
        %v1765 = vunpack.c.l.b16 %v1726
        %v1766 = vunpack.c.l.b16 %v1727
        %v1767 = vunpack.c.l.b16 %v1728
        %v1768 = vpack.c.b16 %v1765, %v1764
        %v1769 = vpack.c.b16 %v1767, %v1766
        %v1773 = vsel %vm660, %v1759, 0
        %1775 = vmatprep.subr.bf16.mxu0 0
        %1776 = vmatpush1.bf16.msra.mxu0 %v1768
        %1777 = vmatprep.subr.bf16.mxu0 0
        %1778 = vmatpush1.bf16.msra.mxu0 %v1769
        %1779 = vmatprep.subr.bf16.mxu0 0
        %1780 = vmatpush1.bf16.msra.mxu0 0
        %1781 = vmatprep.subr.bf16.mxu0 0
        %1782 = vmatpush1.bf16.msra.mxu0 0
        %1783 = vmatprep.subr.bf16.mxu0 0
        %1784 = vmatpush1.bf16.msra.mxu0 0
        %1785 = vmatprep.subr.bf16.mxu0 0
        %1786 = vmatpush1.bf16.msra.mxu0 0
        %1787 = vmatprep.subr.bf16.mxu0 0
        %1788 = vmatpush1.bf16.msra.mxu0 0
        %1789 = vmatprep.subr.bf16.mxu0 0
        %1790 = vmatpush1.bf16.msra.mxu0 0
        %1791 = vmatprep.subr.bf16.mxu0 0
        %1792 = vmatpush1.bf16.msra.mxu0 0
        %1793 = vmatprep.subr.bf16.mxu0 0
        %1794 = vmatpush1.bf16.msra.mxu0 0
        %1795 = vmatprep.subr.bf16.mxu0 0
        %1796 = vmatpush1.bf16.msra.mxu0 0
        %1797 = vmatprep.subr.bf16.mxu0 0
        %1798 = vmatpush1.bf16.msra.mxu0 0
        %1799 = vmatprep.subr.bf16.mxu0 0
        %1800 = vmatpush1.bf16.msra.mxu0 0
        %1801 = vmatprep.subr.bf16.mxu0 0
        %1802 = vmatpush1.bf16.msra.mxu0 0
        %1803 = vmatprep.subr.bf16.mxu0 0
        %1804 = vmatpush1.bf16.msra.mxu0 0
        %1805 = vmatprep.subr.bf16.mxu0 0
        %1806 = vmatpush1.bf16.msra.mxu0 0
        %1807 = vmatprep.mubr.bf16.mxu0 0
        %1808 = vmatmul.mubr.bf16.gmra.mrb[0].mxu0 %v1773
        %v1809 = vpop.f32.mrb[0].mxu0
        %v1810 = vadd.f32 %v1734, %v1809
        %v1811 = vpop.f32.mrb[0].mxu0
        %v1812 = vpop.f32.mrb[0].mxu0
        %v1813 = vpop.f32.mrb[0].mxu0
        %1814 = vdwg.mxu0
        %v1815 = vpack.c.bf16 %v1810, %v1810
        %v1816 = vld [vmem:[%s10] sm:$0xf]
        %v1817 = vld [vmem:[%s10 + $0x4] sm:$0xf]
        %v1818 = vld [vmem:[%s10 + $0x8] sm:$0xf]
        %v1819 = vld [vmem:[%s10 + $0xc] sm:$0xf]
        %v1820 = vld [vmem:[%s11] sm:$0x1]
        %v1822 = vlaneseq
        %v1823 = vshrl.u32 %v1822, 7
        %v1824 = vsub.s32 0, %v1823
        %v1825 = vrot.slane %v1820, %v1824
        %v1831 = vunpack.c.l.b16 %v1816
        %v1832 = vunpack.c.l.b16 %v1817
        %v1833 = vunpack.c.l.b16 %v1818
        %v1834 = vunpack.c.l.b16 %v1819
        %v1835 = vpack.c.b16 %v1832, %v1831
        %v1836 = vpack.c.b16 %v1834, %v1833
        %v1840 = vsel %vm660, %v1815, 0
        %1842 = vmatprep.subr.bf16.mxu0 0
        %1843 = vmatpush1.bf16.msra.mxu0 %v1835
        %1844 = vmatprep.subr.bf16.mxu0 0
        %1845 = vmatpush1.bf16.msra.mxu0 %v1836
        %1846 = vmatprep.subr.bf16.mxu0 0
        %1847 = vmatpush1.bf16.msra.mxu0 0
        %1848 = vmatprep.subr.bf16.mxu0 0
        %1849 = vmatpush1.bf16.msra.mxu0 0
        %1850 = vmatprep.subr.bf16.mxu0 0
        %1851 = vmatpush1.bf16.msra.mxu0 0
        %1852 = vmatprep.subr.bf16.mxu0 0
        %1853 = vmatpush1.bf16.msra.mxu0 0
        %1854 = vmatprep.subr.bf16.mxu0 0
        %1855 = vmatpush1.bf16.msra.mxu0 0
        %1856 = vmatprep.subr.bf16.mxu0 0
        %1857 = vmatpush1.bf16.msra.mxu0 0
        %1858 = vmatprep.subr.bf16.mxu0 0
        %1859 = vmatpush1.bf16.msra.mxu0 0
        %1860 = vmatprep.subr.bf16.mxu0 0
        %1861 = vmatpush1.bf16.msra.mxu0 0
        %1862 = vmatprep.subr.bf16.mxu0 0
        %1863 = vmatpush1.bf16.msra.mxu0 0
        %1864 = vmatprep.subr.bf16.mxu0 0
        %1865 = vmatpush1.bf16.msra.mxu0 0
        %1866 = vmatprep.subr.bf16.mxu0 0
        %1867 = vmatpush1.bf16.msra.mxu0 0
        %1868 = vmatprep.subr.bf16.mxu0 0
        %1869 = vmatpush1.bf16.msra.mxu0 0
        %1870 = vmatprep.subr.bf16.mxu0 0
        %1871 = vmatpush1.bf16.msra.mxu0 0
        %1872 = vmatprep.subr.bf16.mxu0 0
        %1873 = vmatpush1.bf16.msra.mxu0 0
        %1874 = vmatprep.mubr.bf16.mxu0 0
        %1875 = vmatmul.mubr.bf16.gmra.mrb[0].mxu0 %v1840
        %v1876 = vpop.f32.mrb[0].mxu0
        %v1877 = vadd.f32 %v1825, %v1876
        %v1878 = vpop.f32.mrb[0].mxu0
        %v1879 = vpop.f32.mrb[0].mxu0
        %v1880 = vpop.f32.mrb[0].mxu0
        %1881 = vdwg.mxu0
        %1882 = vst [vmem:[%s557] sm:$0xff] %v1877
        %v1883 = vsel %vm1264, %v1465, 0.0
        %1884 = vadd.xlane.f32.xlu0 %v1883
        %v1885 = vpop.xlane.xlu0 %1884
        %v1886 = vsel %vm1264, %v1466, 0.0
        %1887 = vadd.xlane.f32.xlu0 %v1886
        %v1888 = vpop.xlane.xlu0 %1887
        %v1889 = vsel %vm1264, %v1467, 0.0
        %1890 = vadd.xlane.f32.xlu0 %v1889
        %v1891 = vpop.xlane.xlu0 %1890
        %v1892 = vsel %vm1264, %v1468, 0.0
        %1893 = vadd.xlane.f32.xlu0 %v1892
        %v1894 = vpop.xlane.xlu0 %1893
        %v1895 = vsel %vm1264, %v1469, 0.0
        %1896 = vadd.xlane.f32.xlu0 %v1895
        %v1897 = vpop.xlane.xlu0 %1896
        %v1898 = vsel %vm1264, %v1470, 0.0
        %1899 = vadd.xlane.f32.xlu0 %v1898
        %v1900 = vpop.xlane.xlu0 %1899
        %v1901 = vsel %vm1264, %v1471, 0.0
        %1902 = vadd.xlane.f32.xlu0 %v1901
        %v1903 = vpop.xlane.xlu0 %1902
        %v1904 = vsel %vm1264, %v1472, 0.0
        %1905 = vadd.xlane.f32.xlu0 %v1904
        %v1906 = vpop.xlane.xlu0 %1905
        %v1907 = vsel %vm1264, %v1473, 0.0
        %1908 = vadd.xlane.f32.xlu0 %v1907
        %v1909 = vpop.xlane.xlu0 %1908
        %v1910 = vsel %vm1264, %v1474, 0.0
        %1911 = vadd.xlane.f32.xlu0 %v1910
        %v1912 = vpop.xlane.xlu0 %1911
        %v1913 = vsel %vm1264, %v1475, 0.0
        %1914 = vadd.xlane.f32.xlu0 %v1913
        %v1915 = vpop.xlane.xlu0 %1914
        %v1916 = vsel %vm1264, %v1476, 0.0
        %1917 = vadd.xlane.f32.xlu0 %v1916
        %v1918 = vpop.xlane.xlu0 %1917
        %v1919 = vsel %vm1264, %v1477, 0.0
        %1920 = vadd.xlane.f32.xlu0 %v1919
        %v1921 = vpop.xlane.xlu0 %1920
        %v1922 = vsel %vm1264, %v1478, 0.0
        %1923 = vadd.xlane.f32.xlu0 %v1922
        %v1924 = vpop.xlane.xlu0 %1923
        %v1925 = vsel %vm1264, %v1479, 0.0
        %1926 = vadd.xlane.f32.xlu0 %v1925
        %v1927 = vpop.xlane.xlu0 %1926
        %v1928 = vsel %vm1264, %v1480, 0.0
        %1929 = vadd.xlane.f32.xlu0 %v1928
        %v1930 = vpop.xlane.xlu0 %1929
        %v1931 = vmul.f32 %v1885, 0.25
        %v1932 = vmul.f32 %v1888, 0.25
        %v1933 = vmul.f32 %v1891, 0.25
        %v1934 = vmul.f32 %v1894, 0.25
        %v1935 = vmul.f32 %v1897, 0.25
        %v1936 = vmul.f32 %v1900, 0.25
        %v1937 = vmul.f32 %v1903, 0.25
        %v1938 = vmul.f32 %v1906, 0.25
        %v1939 = vmul.f32 %v1909, 0.25
        %v1940 = vmul.f32 %v1912, 0.25
        %v1941 = vmul.f32 %v1915, 0.25
        %v1942 = vmul.f32 %v1918, 0.25
        %v1943 = vmul.f32 %v1921, 0.25
        %v1944 = vmul.f32 %v1924, 0.25
        %v1945 = vmul.f32 %v1927, 0.25
        %v1946 = vmul.f32 %v1930, 0.25
        %v1963 = vlaneseq
        %v1964 = vand.u32 %v1963, 127
        %v1965 = vlaneseq
        %v1966 = vshrl.u32 %v1965, 7
        %v1967 = vsub.s32 %v1964, %v1966
        %v1968 = vrot.slane %v1931, %v1967
        %v1969 = vadd.s32 %v1964, 4294967288
        %v1970 = vlaneseq
        %v1971 = vshrl.u32 %v1970, 7
        %v1972 = vsub.s32 %v1969, %v1971
        %v1973 = vrot.slane %v1932, %v1972
        %vm1974 = vcmask 130112
        %v1975 = vsel %vm1974, %v1973, %v1968
        %v1976 = vlaneseq
        %v1977 = vshrl.u32 %v1976, 7
        %v1978 = vsub.s32 %v1964, %v1977
        %v1979 = vrot.slane %v1933, %v1978
        %v1980 = vlaneseq
        %v1981 = vshrl.u32 %v1980, 7
        %v1982 = vsub.s32 %v1969, %v1981
        %v1983 = vrot.slane %v1934, %v1982
        %v1984 = vsel %vm1974, %v1983, %v1979
        %v1985 = vlaneseq
        %v1986 = vshrl.u32 %v1985, 7
        %v1987 = vsub.s32 %v1964, %v1986
        %v1988 = vrot.slane %v1935, %v1987
        %v1989 = vlaneseq
        %v1990 = vshrl.u32 %v1989, 7
        %v1991 = vsub.s32 %v1969, %v1990
        %v1992 = vrot.slane %v1936, %v1991
        %v1993 = vsel %vm1974, %v1992, %v1988
        %v1994 = vlaneseq
        %v1995 = vshrl.u32 %v1994, 7
        %v1996 = vsub.s32 %v1964, %v1995
        %v1997 = vrot.slane %v1937, %v1996
        %v1998 = vlaneseq
        %v1999 = vshrl.u32 %v1998, 7
        %v2000 = vsub.s32 %v1969, %v1999
        %v2001 = vrot.slane %v1938, %v2000
        %v2002 = vsel %vm1974, %v2001, %v1997
        %v2003 = vlaneseq
        %v2004 = vshrl.u32 %v2003, 7
        %v2005 = vsub.s32 %v1964, %v2004
        %v2006 = vrot.slane %v1939, %v2005
        %v2007 = vlaneseq
        %v2008 = vshrl.u32 %v2007, 7
        %v2009 = vsub.s32 %v1969, %v2008
        %v2010 = vrot.slane %v1940, %v2009
        %v2011 = vsel %vm1974, %v2010, %v2006
        %v2012 = vlaneseq
        %v2013 = vshrl.u32 %v2012, 7
        %v2014 = vsub.s32 %v1964, %v2013
        %v2015 = vrot.slane %v1941, %v2014
        %v2016 = vlaneseq
        %v2017 = vshrl.u32 %v2016, 7
        %v2018 = vsub.s32 %v1969, %v2017
        %v2019 = vrot.slane %v1942, %v2018
        %v2020 = vsel %vm1974, %v2019, %v2015
        %v2021 = vlaneseq
        %v2022 = vshrl.u32 %v2021, 7
        %v2023 = vsub.s32 %v1964, %v2022
        %v2024 = vrot.slane %v1943, %v2023
        %v2025 = vlaneseq
        %v2026 = vshrl.u32 %v2025, 7
        %v2027 = vsub.s32 %v1969, %v2026
        %v2028 = vrot.slane %v1944, %v2027
        %v2029 = vsel %vm1974, %v2028, %v2024
        %v2030 = vlaneseq
        %v2031 = vshrl.u32 %v2030, 7
        %v2032 = vsub.s32 %v1964, %v2031
        %v2033 = vrot.slane %v1945, %v2032
        %v2034 = vlaneseq
        %v2035 = vshrl.u32 %v2034, 7
        %v2036 = vsub.s32 %v1969, %v2035
        %v2037 = vrot.slane %v1946, %v2036
        %v2038 = vsel %vm1974, %v2037, %v2033
        %v2039 = vsel %vm627, %v1984, %v1975
        %v2040 = vsel %vm630, %v1993, %v2039
        %v2041 = vsel %vm633, %v2002, %v2040
        %v2042 = vsel %vm636, %v2011, %v2041
        %v2043 = vsel %vm639, %v2020, %v2042
        %v2044 = vsel %vm642, %v2029, %v2043
        %v2045 = vsel %vm645, %v2038, %v2044
        %vm2047 = vcmask 130048
        %v2048 = vsel %vm2047, %v2045, 0.0
        %2049 = vst [vmem:[%s564] sm:$0xff] %v2048
        %s2050 = sand.u32 %s303, 1
        %s2051 = scalar_lea.sflag [#allocation4], %s2050
        %s2052 = sand.u32 %s303, 1
        %s2053 = smul.addr %s2052, 8
        %s2054 = scalar_lea.vmem [#allocation16], %s2053
        %s2055 = sand.u32 %s329, 1
        %s2056 = scalar_lea.sflag [#allocation18], %s2055
        %s2057 = sand.u32 %s329, 1
        %s2058 = smul.addr %s2057, 8
        %s2059 = scalar_lea.vmem [#allocation17], %s2058
        // Predicated region
        $region101: #{tpu_custom_call.1} parent=67 // pred_check
          %p2060 = pneg %p313
        $region102: #{tpu_custom_call.1} parent=67 // pred_check_branch
          %2062 = sbr.rel (%p2060) target = $region104
        $region103: #{tpu_custom_call.1} parent=67 // pred_region
          %s2064 = ssub.s32 128, 128
          %2065 = vsyncadd %s2051, %s2064
          %s2066 = smul.addr %s38, 128
          %s2067 = scalar_lea.hbm %s12, %s2066
          %s2069 = sshll.u32 %s2054, 4
          %s2070 = int_to_ptr.vmem [resolvable:$true] %s2069
          %2072 = dma.vmem_to_hbm [thread:$0]  %s2070, 128, %s2067, %s2051
        $region104: #{tpu_custom_call.1} parent=67 // pred_fallthru
          _
        // Predicated region
        $region105: #{tpu_custom_call.1} parent=67 // pred_check
          %p2073 = pneg %p339
        $region106: #{tpu_custom_call.1} parent=67 // pred_check_branch
          %2075 = sbr.rel (%p2073) target = $region108
        $region107: #{tpu_custom_call.1} parent=67 // pred_region
          %s2077 = ssub.s32 128, 128
          %2078 = vsyncadd %s2056, %s2077
          %s2079 = smul.addr %s38, 128
          %s2080 = scalar_lea.hbm %s13, %s2079
          %s2082 = sshll.u32 %s2059, 4
          %s2083 = int_to_ptr.vmem [resolvable:$true] %s2082
          %2085 = dma.vmem_to_hbm [thread:$0]  %s2083, 128, %s2080, %s2056
        $region108: #{tpu_custom_call.1} parent=67 // pred_fallthru
          _
      $region68: #{tpu_custom_call.1} parent=5 // pred_fallthru
        _
      %p2086 = scmp.le.s32.totalorder 2, %s33
      // Predicated region
      $region109: #{tpu_custom_call.1} parent=5 // pred_check
        %p2087 = pneg %p2086
      $region110: #{tpu_custom_call.1} parent=5 // pred_check_branch
        %2089 = sbr.rel (%p2087) target = $region112
      $region111: #{tpu_custom_call.1} parent=5 // pred_region
        %s2090 = ssub.s32 %s33, 2
        // Predicated region
        $region113: #{tpu_custom_call.1} parent=111 // pred_check
          %p2091 = pneg %p319
        $region114: #{tpu_custom_call.1} parent=111 // pred_check_branch
          %2093 = sbr.rel (%p2091) target = $region116
        $region115: #{tpu_custom_call.1} parent=111 // pred_region
          %s2094 = sand.u32 %s304, 1
          %s2095 = scalar_lea.sflag [#allocation4], %s2094
          %s2096 = sand.u32 %s304, 1
          %s2097 = smul.addr %s2096, 8
          %s2098 = scalar_lea.vmem [#allocation16], %s2097
          %2099 = dma.done %s2095, 128
        $region116: #{tpu_custom_call.1} parent=111 // pred_fallthru
          _
        // Predicated region
        $region117: #{tpu_custom_call.1} parent=111 // pred_check
          %p2100 = pneg %p345
        $region118: #{tpu_custom_call.1} parent=111 // pred_check_branch
          %2102 = sbr.rel (%p2100) target = $region120
        $region119: #{tpu_custom_call.1} parent=111 // pred_region
          %s2103 = sand.u32 %s330, 1
          %s2104 = scalar_lea.sflag [#allocation18], %s2103
          %s2105 = sand.u32 %s330, 1
          %s2106 = smul.addr %s2105, 8
          %s2107 = scalar_lea.vmem [#allocation17], %s2106
          %2108 = dma.done %s2104, 128
        $region120: #{tpu_custom_call.1} parent=111 // pred_fallthru
          _
      $region112: #{tpu_custom_call.1} parent=5 // pred_fallthru
        _
    $region6: #{tpu_custom_call.1} parent=1 // loop_footer
      %s37 = sadd.s32 1, %s33
    $region7: #{tpu_custom_call.1} parent=1 // loop_footer_branch
      %32 = sbr.rel target = $region3
    $region8: #{tpu_custom_call.1} parent=1 // loop_exit
      _
    %2109 = vsyncpa [#allocation3], 1
    %s2110 = scalar_lea.sflag [#allocation3], 1
    %2111 = vsyncpa %s2110, 1
    %2112 = vsyncpa [#allocation6], 1
    %2113 = vsyncpa [#allocation9], 1
    %2114 = vsyncpa [#allocation12], 1
    %2115 = vsyncpa [#allocation15], 1
    %2116 = vsyncpa [#allocation4], 1
    %s2117 = scalar_lea.sflag [#allocation4], 1
    %2118 = vsyncpa %s2117, 1
    %2119 = vsyncpa [#allocation18], 1
    %s2120 = scalar_lea.sflag [#allocation18], 1
    %2121 = vsyncpa %s2120, 1

</llo_original>
